<compile_context>
chip_gen: v6e
topology: v6e:2x2x1
jax: 0.10.0
libtpu: 0.0.40
codegen_flags: <defaults>
</compile_context>

<pallas_src>
import jax
import jax.numpy as jnp
from jax.experimental import pallas as pl
from jax.experimental.pallas import tpu as pltpu

LN_EPS = 1e-5


# ----------------------------- Pallas kernel --------------------------------

def _grid_gating_kernel(x_ref, w_ref, db_ref, g_ref, be_ref, o_ref):
    """Fused LayerNorm(v) -> Dense over the grid axis n -> u * (v + 1).

    Block shapes (per grid step):
      x_ref : [tb, n, TM*c]     TM grid-columns; channels (u|v) per column
      w_ref : [n, n]            Dense_0 weight, bf16 (PyTorch [out, in])
      db_ref: [n, 1]            Dense_0 bias, f32
      g_ref : [1, half]         LayerNorm weight, f32
      be_ref: [1, half]         LayerNorm bias, f32
      o_ref : [tb, n, TM*half]  gated output for the same TM columns
    """
    tb, n, _ = x_ref.shape
    half = g_ref.shape[-1]
    c = 2 * half
    tm = o_ref.shape[-1] // half

    # Per-step invariants, hoisted out of the column loop.
    w = w_ref[...]                        # already bf16 (cast once in wrapper)
    gamma = g_ref[...]                    # [1, half]
    beta = be_ref[...]                    # [1, half]
    db1 = db_ref[...] + 1.0               # [n, 1]: folds Dense bias and the "+1"

    def per_batch(b, carry):
        # Static lane offsets -> every load/store below is a full-tile,
        # unmasked VMEM access with n on sublanes (natural MXU orientation).
        for j in range(tm):
            base = j * c
            v = x_ref[b, :, base + half:base + c].astype(jnp.float32)  # [n, half]
            # Two-pass LayerNorm statistics in f32 (numerically safe).
            mean = jnp.mean(v, axis=-1, keepdims=True)
            vc = v - mean
            var = jnp.mean(vc * vc, axis=-1, keepdims=True)
            vn = vc * jax.lax.rsqrt(var + LN_EPS) * gamma + beta
            # Dense mix along n on the MXU (bf16 in, f32 accumulate), fused
            # with bias, the "+1" and the gating multiply.
            y = jnp.dot(w, vn.astype(jnp.bfloat16),
                        preferred_element_type=jnp.float32)            # [n, half]
            u = x_ref[b, :, base:base + half].astype(jnp.float32)
            o_ref[b, :, j * half:(j + 1) * half] = (
                u * (y + db1)).astype(o_ref.dtype)
        return carry

    jax.lax.fori_loop(0, tb, per_batch, 0, unroll=True)


# ----------------------------- tiling heuristics -----------------------------

def _vmem_limit_bytes():
    """Generation-aware VMEM limit: ~3/4 of physical, capped at 96 MiB.

    v5e/v6e (128 MiB physical) -> 96 MiB; v7x (64 MiB per core) -> 48 MiB.
    """
    try:
        phys = pltpu.get_tpu_info().vmem_capacity_bytes
    except Exception:
        phys = 64 << 20          # conservative (v7x per-core) when unknown
    return int(min(phys * 3 // 4, 96 << 20))


def _pick_tiles(B, n, m, c, x_itemsize, out_itemsize, budget_bytes,
                *, max_tb=8, max_cols=64):
    """Largest (tb, TM) with B%tb==0, m%TM==0 whose double-buffered blocks fit
    `budget_bytes`, preferring a large TM (contiguous HBM DMA chunks). Keeps
    at least two grid steps so the v7x megacore can shard the grid."""
    half = c // 2

    def fits(tb, tm):
        x_blk = tb * n * tm * c * x_itemsize
        o_blk = tb * n * tm * half * out_itemsize
        temps = 6 * n * half * 4              # per-column f32 temporaries
        return 2 * (x_blk + o_blk) + temps <= budget_bytes

    tm_cands = [d for d in range(m, 0, -1) if m % d == 0]
    tb_cands = [d for d in range(min(B, max_tb), 0, -1) if B % d == 0]
    tb, tm = tb_cands[-1], tm_cands[-1]       # minimal fallback
    for t_m in tm_cands:
        for t_b in tb_cands:
            if t_b * t_m <= max_cols and fits(t_b, t_m):
                tb, tm = t_b, t_m
                break
        else:
            continue
        break

    # Keep >= 2 grid steps along a "parallel" axis (v7x has 2 TensorCores).
    if (B // tb) * (m // tm) < 2:
        smaller_tm = [d for d in tm_cands if d < tm]
        smaller_tb = [d for d in tb_cands if d < tb]
        if smaller_tm:
            tm = smaller_tm[0]
        elif smaller_tb:
            tb = smaller_tb[0]
    return tb, tm


# ----------------------------- wrapper ---------------------------------------

def grid_gating_unit(x, dense_w, dense_b, ln_gamma, ln_beta):
    """x: [B, n, m, c] (channels-last). Returns u * (Dense_n(LN(v)) + 1) of
    shape [B, n, m, c // 2]."""
    B, n, m, c = x.shape
    assert c % 2 == 0, "channel dim must be even"
    half = c // 2
    # Lane-dense requirement: u/v and per-column slices sit on 128-lane bounds.
    # TODO(synk): general (non-multiple-of-128) c//2 needs a padded/masked variant.
    assert half % 128 == 0, "c // 2 must be a multiple of 128 for this kernel"

    out_dtype = x.dtype
    xi = jnp.dtype(x.dtype).itemsize
    oi = jnp.dtype(out_dtype).itemsize

    vmem_limit = _vmem_limit_bytes()
    # Leave ~40% of the limit for compiler scratch, params and pipeline slack.
    tb, tm = _pick_tiles(B, n, m, c, xi, oi, budget_bytes=int(vmem_limit * 0.6))

    x2 = x.reshape(B, n, m * c)               # free reshape (channels are minor)

    grid = (B // tb, m // tm)
    in_specs = [
        pl.BlockSpec((tb, n, tm * c), lambda bb, jj: (bb, 0, jj)),   # x tile
        pl.BlockSpec((n, n), lambda bb, jj: (0, 0)),                 # W (bf16)
        pl.BlockSpec((n, 1), lambda bb, jj: (0, 0)),                 # Dense bias
        pl.BlockSpec((1, half), lambda bb, jj: (0, 0)),              # LN gamma
        pl.BlockSpec((1, half), lambda bb, jj: (0, 0)),              # LN beta
    ]
    out_spec = pl.BlockSpec((tb, n, tm * half), lambda bb, jj: (bb, 0, jj))

    cost = pl.CostEstimate(
        flops=2 * B * m * n * n * half + 10 * B * m * n * half,
        transcendentals=B * m * n,                                   # one rsqrt per row
        bytes_accessed=(xi * B * n * m * c                           # x read once
                        + oi * B * n * m * half                      # out written once
                        + 2 * n * n + 4 * n + 2 * 4 * half))         # params, fetched once

    out2 = pl.pallas_call(
        _grid_gating_kernel,
        out_shape=jax.ShapeDtypeStruct((B, n, m * half), out_dtype),
        grid=grid,
        in_specs=in_specs,
        out_specs=out_spec,
        compiler_params=pltpu.CompilerParams(
            dimension_semantics=("parallel", "parallel"),
            vmem_limit_bytes=vmem_limit),
        cost_estimate=cost,
    )(x2,
      dense_w.astype(jnp.bfloat16),                  # cast once, halves weight DMA
      dense_b.reshape(n, 1).astype(jnp.float32),
      ln_gamma.reshape(1, half).astype(jnp.float32),
      ln_beta.reshape(1, half).astype(jnp.float32))

    return out2.reshape(B, n, m, half)


# ----------------------------- pure-JAX reference ----------------------------

def grid_gating_unit_ref(x, dense_w, dense_b, ln_gamma, ln_beta):
    """Mirrors the PyTorch module (same bf16-MXU dtype policy as the kernel)."""
    half = x.shape[-1] // 2
    u, v = x[..., :half], x[..., half:]
    mean = jnp.mean(v, axis=-1, keepdims=True)
    var = jnp.mean(jnp.square(v - mean), axis=-1, keepdims=True)
    vn = (v - mean) * jax.lax.rsqrt(var + LN_EPS) * ln_gamma + ln_beta
    # permute(0,3,2,1) -> Linear(n, n) -> permute back  ==  mix along axis 1.
    y = jnp.einsum("ab,ibjk->iajk",
                   dense_w.astype(jnp.bfloat16), vn.astype(jnp.bfloat16),
                   preferred_element_type=jnp.float32)
    y = y + dense_b[None, :, None, None]
    return u * (y + 1.0)


if __name__ == "__main__":
    # x: [batch, n (grid axis mixed by Dense_0), m, c];  LayerNorm over c // 2.
    B, n, m, c = 2, 16, 16, 256

    key = jax.random.PRNGKey(0)
    kx, kw, kb = jax.random.split(key, 3)
    x = jax.random.normal(kx, (B, n, m, c), jnp.float32)

    bound = 1.0 / (n ** 0.5)                      # nn.Linear default init range
    dense_w = jax.random.uniform(kw, (n, n), jnp.float32, -bound, bound)
    dense_b = jax.random.uniform(kb, (n,), jnp.float32, -bound, bound)
    ln_gamma = jnp.ones((c // 2,), jnp.float32)   # nn.LayerNorm defaults
    ln_beta = jnp.zeros((c // 2,), jnp.float32)

    out = jax.jit(grid_gating_unit)(x, dense_w, dense_b, ln_gamma, ln_beta)
    out = jax.block_until_ready(out)
    assert out.shape == (B, n, m, c // 2), out.shape

    ref = grid_gating_unit_ref(x, dense_w, dense_b, ln_gamma, ln_beta)
    rel_err = jnp.linalg.norm(out - ref) / jnp.linalg.norm(ref)
    assert float(rel_err) < 2e-3, f"relative error too large: {float(rel_err)}"

    print("KERNEL_OK")
</pallas_src>

<mosaic_0001>
module attributes {stable_mosaic.version = 11 : i64} {
  func.func @_grid_gating_kernel(%arg0: i32, %arg1: i32, %arg2: memref<2x16x2048xf32, #tpu.memory_space<vmem>>, %arg3: memref<16x16xbf16, #tpu.memory_space<vmem>>, %arg4: memref<16x1xf32, #tpu.memory_space<vmem>>, %arg5: memref<1x128xf32, #tpu.memory_space<vmem>>, %arg6: memref<1x128xf32, #tpu.memory_space<vmem>>, %arg7: memref<2x16x1024xf32, #tpu.memory_space<vmem>>) attributes {dimension_semantics = [#tpu.dimension_semantics<parallel>, #tpu.dimension_semantics<parallel>], iteration_bounds = array<i64: 1, 2>, scalar_prefetch = 0 : i64, scratch_operands = 0 : i64, tpu.core_type = #tpu.core_type<tc>, window_params = [{transform_indices = @transform_0, window_bounds = array<i64: 2, 16, 2048>}, {pipeline_mode = #tpu.pipeline_mode<synchronous>, transform_indices = @transform_1, window_bounds = array<i64: 16, 16>}, {pipeline_mode = #tpu.pipeline_mode<synchronous>, transform_indices = @transform_2, window_bounds = array<i64: 16, 1>}, {pipeline_mode = #tpu.pipeline_mode<synchronous>, transform_indices = @transform_3, window_bounds = array<i64: 1, 128>}, {pipeline_mode = #tpu.pipeline_mode<synchronous>, transform_indices = @transform_4, window_bounds = array<i64: 1, 128>}, {transform_indices = @transform_5, window_bounds = array<i64: 2, 16, 1024>}]} {
    %c0 = arith.constant 0 : index
    %c0_0 = arith.constant 0 : index
    %0 = vector.load %arg3[%c0, %c0_0] : memref<16x16xbf16, #tpu.memory_space<vmem>>, vector<16x16xbf16>
    %c0_1 = arith.constant 0 : index
    %c0_2 = arith.constant 0 : index
    %1 = vector.load %arg5[%c0_1, %c0_2] : memref<1x128xf32, #tpu.memory_space<vmem>>, vector<1x128xf32>
    %c0_3 = arith.constant 0 : index
    %c0_4 = arith.constant 0 : index
    %2 = vector.load %arg6[%c0_3, %c0_4] : memref<1x128xf32, #tpu.memory_space<vmem>>, vector<1x128xf32>
    %c0_5 = arith.constant 0 : index
    %c0_6 = arith.constant 0 : index
    %3 = vector.load %arg4[%c0_5, %c0_6] : memref<16x1xf32, #tpu.memory_space<vmem>>, vector<16x1xf32>
    %cst = arith.constant 1.000000e+00 : f32
    %4 = vector.broadcast %cst : f32 to vector<16x1xf32>
    %5 = arith.addf %3, %4 : vector<16x1xf32>
    %c0_i32 = arith.constant 0 : i32
    %6 = arith.index_cast %c0_i32 : i32 to index
    %c0_7 = arith.constant 0 : index
    %c128 = arith.constant 128 : index
    %7 = vector.load %arg2[%6, %c0_7, %c128] : memref<2x16x2048xf32, #tpu.memory_space<vmem>>, vector<1x16x128xf32>
    %8 = vector.shape_cast %7 : vector<1x16x128xf32> to vector<16x128xf32>
    %cst_8 = arith.constant dense<0.000000e+00> : vector<16xf32>
    %9 = vector.multi_reduction <add>, %8, %cst_8 [1] : vector<16x128xf32> to vector<16xf32>
    %10 = vector.shape_cast %9 : vector<16xf32> to vector<16x1xf32>
    %cst_9 = arith.constant 1.280000e+02 : f32
    %11 = vector.broadcast %cst_9 : f32 to vector<16x1xf32>
    %12 = arith.divf %10, %11 : vector<16x1xf32>
    %13 = vector.broadcast %12 : vector<16x1xf32> to vector<16x128xf32>
    %14 = arith.subf %8, %13 : vector<16x128xf32>
    %15 = arith.mulf %14, %14 : vector<16x128xf32>
    %cst_10 = arith.constant dense<0.000000e+00> : vector<16xf32>
    %16 = vector.multi_reduction <add>, %15, %cst_10 [1] : vector<16x128xf32> to vector<16xf32>
    %17 = vector.shape_cast %16 : vector<16xf32> to vector<16x1xf32>
    %cst_11 = arith.constant 1.280000e+02 : f32
    %18 = vector.broadcast %cst_11 : f32 to vector<16x1xf32>
    %19 = arith.divf %17, %18 : vector<16x1xf32>
    %cst_12 = arith.constant 9.99999974E-6 : f32
    %20 = vector.broadcast %cst_12 : f32 to vector<16x1xf32>
    %21 = arith.addf %19, %20 : vector<16x1xf32>
    %22 = math.rsqrt %21 : vector<16x1xf32>
    %23 = vector.broadcast %22 : vector<16x1xf32> to vector<16x128xf32>
    %24 = arith.mulf %14, %23 : vector<16x128xf32>
    %25 = vector.broadcast %1 : vector<1x128xf32> to vector<16x128xf32>
    %26 = arith.mulf %24, %25 : vector<16x128xf32>
    %27 = vector.broadcast %2 : vector<1x128xf32> to vector<16x128xf32>
    %28 = arith.addf %26, %27 : vector<16x128xf32>
    %29 = arith.truncf %28 : vector<16x128xf32> to vector<16x128xbf16>
    %cst_13 = arith.constant dense<0.000000e+00> : vector<16x128xf32>
    %30 = tpu.matmul %0, %29, %cst_13 {dimension_numbers = #tpu.dot_dimension_numbers<[1], [0], [0], [1], [0, 0, 1, 1], [], []>} : vector<16x16xbf16>, vector<16x128xbf16>, vector<16x128xf32> -> vector<16x128xf32>
    %31 = arith.index_cast %c0_i32 : i32 to index
    %c0_14 = arith.constant 0 : index
    %c0_15 = arith.constant 0 : index
    %32 = vector.load %arg2[%31, %c0_14, %c0_15] : memref<2x16x2048xf32, #tpu.memory_space<vmem>>, vector<1x16x128xf32>
    %33 = vector.shape_cast %32 : vector<1x16x128xf32> to vector<16x128xf32>
    %34 = vector.broadcast %5 : vector<16x1xf32> to vector<16x128xf32>
    %35 = arith.addf %30, %34 : vector<16x128xf32>
    %36 = arith.mulf %33, %35 : vector<16x128xf32>
    %37 = arith.index_cast %c0_i32 : i32 to index
    %c0_16 = arith.constant 0 : index
    %c0_17 = arith.constant 0 : index
    %38 = vector.load %arg7[%37, %c0_16, %c0_17] : memref<2x16x1024xf32, #tpu.memory_space<vmem>>, vector<1x16x128xf32>
    %39 = vector.shape_cast %38 : vector<1x16x128xf32> to vector<16x128xf32>
    %40 = vector.shape_cast %36 : vector<16x128xf32> to vector<1x16x128xf32>
    tpu.vector_store %arg7[%37, %c0_16, %c0_17], %40 {strides = array<i32>} : memref<2x16x1024xf32, #tpu.memory_space<vmem>>, vector<1x16x128xf32>,
    %41 = arith.index_cast %c0_i32 : i32 to index
    %c0_18 = arith.constant 0 : index
    %c384 = arith.constant 384 : index
    %42 = vector.load %arg2[%41, %c0_18, %c384] : memref<2x16x2048xf32, #tpu.memory_space<vmem>>, vector<1x16x128xf32>
    %43 = vector.shape_cast %42 : vector<1x16x128xf32> to vector<16x128xf32>
    %cst_19 = arith.constant dense<0.000000e+00> : vector<16xf32>
    %44 = vector.multi_reduction <add>, %43, %cst_19 [1] : vector<16x128xf32> to vector<16xf32>
    %45 = vector.shape_cast %44 : vector<16xf32> to vector<16x1xf32>
    %cst_20 = arith.constant 1.280000e+02 : f32
    %46 = vector.broadcast %cst_20 : f32 to vector<16x1xf32>
    %47 = arith.divf %45, %46 : vector<16x1xf32>
    %48 = vector.broadcast %47 : vector<16x1xf32> to vector<16x128xf32>
    %49 = arith.subf %43, %48 : vector<16x128xf32>
    %50 = arith.mulf %49, %49 : vector<16x128xf32>
    %cst_21 = arith.constant dense<0.000000e+00> : vector<16xf32>
    %51 = vector.multi_reduction <add>, %50, %cst_21 [1] : vector<16x128xf32> to vector<16xf32>
    %52 = vector.shape_cast %51 : vector<16xf32> to vector<16x1xf32>
    %cst_22 = arith.constant 1.280000e+02 : f32
    %53 = vector.broadcast %cst_22 : f32 to vector<16x1xf32>
    %54 = arith.divf %52, %53 : vector<16x1xf32>
    %cst_23 = arith.constant 9.99999974E-6 : f32
    %55 = vector.broadcast %cst_23 : f32 to vector<16x1xf32>
    %56 = arith.addf %54, %55 : vector<16x1xf32>
    %57 = math.rsqrt %56 : vector<16x1xf32>
    %58 = vector.broadcast %57 : vector<16x1xf32> to vector<16x128xf32>
    %59 = arith.mulf %49, %58 : vector<16x128xf32>
    %60 = vector.broadcast %1 : vector<1x128xf32> to vector<16x128xf32>
    %61 = arith.mulf %59, %60 : vector<16x128xf32>
    %62 = vector.broadcast %2 : vector<1x128xf32> to vector<16x128xf32>
    %63 = arith.addf %61, %62 : vector<16x128xf32>
    %64 = arith.truncf %63 : vector<16x128xf32> to vector<16x128xbf16>
    %cst_24 = arith.constant dense<0.000000e+00> : vector<16x128xf32>
    %65 = tpu.matmul %0, %64, %cst_24 {dimension_numbers = #tpu.dot_dimension_numbers<[1], [0], [0], [1], [0, 0, 1, 1], [], []>} : vector<16x16xbf16>, vector<16x128xbf16>, vector<16x128xf32> -> vector<16x128xf32>
    %66 = arith.index_cast %c0_i32 : i32 to index
    %c0_25 = arith.constant 0 : index
    %c256 = arith.constant 256 : index
    %67 = vector.load %arg2[%66, %c0_25, %c256] : memref<2x16x2048xf32, #tpu.memory_space<vmem>>, vector<1x16x128xf32>
    %68 = vector.shape_cast %67 : vector<1x16x128xf32> to vector<16x128xf32>
    %69 = vector.broadcast %5 : vector<16x1xf32> to vector<16x128xf32>
    %70 = arith.addf %65, %69 : vector<16x128xf32>
    %71 = arith.mulf %68, %70 : vector<16x128xf32>
    %72 = arith.index_cast %c0_i32 : i32 to index
    %c0_26 = arith.constant 0 : index
    %c128_27 = arith.constant 128 : index
    %73 = vector.load %arg7[%72, %c0_26, %c128_27] : memref<2x16x1024xf32, #tpu.memory_space<vmem>>, vector<1x16x128xf32>
    %74 = vector.shape_cast %73 : vector<1x16x128xf32> to vector<16x128xf32>
    %75 = vector.shape_cast %71 : vector<16x128xf32> to vector<1x16x128xf32>
    tpu.vector_store %arg7[%72, %c0_26, %c128_27], %75 {strides = array<i32>} : memref<2x16x1024xf32, #tpu.memory_space<vmem>>, vector<1x16x128xf32>,
    %76 = arith.index_cast %c0_i32 : i32 to index
    %c0_28 = arith.constant 0 : index
    %c640 = arith.constant 640 : index
    %77 = vector.load %arg2[%76, %c0_28, %c640] : memref<2x16x2048xf32, #tpu.memory_space<vmem>>, vector<1x16x128xf32>
    %78 = vector.shape_cast %77 : vector<1x16x128xf32> to vector<16x128xf32>
    %cst_29 = arith.constant dense<0.000000e+00> : vector<16xf32>
    %79 = vector.multi_reduction <add>, %78, %cst_29 [1] : vector<16x128xf32> to vector<16xf32>
    %80 = vector.shape_cast %79 : vector<16xf32> to vector<16x1xf32>
    %cst_30 = arith.constant 1.280000e+02 : f32
    %81 = vector.broadcast %cst_30 : f32 to vector<16x1xf32>
    %82 = arith.divf %80, %81 : vector<16x1xf32>
    %83 = vector.broadcast %82 : vector<16x1xf32> to vector<16x128xf32>
    %84 = arith.subf %78, %83 : vector<16x128xf32>
    %85 = arith.mulf %84, %84 : vector<16x128xf32>
    %cst_31 = arith.constant dense<0.000000e+00> : vector<16xf32>
    %86 = vector.multi_reduction <add>, %85, %cst_31 [1] : vector<16x128xf32> to vector<16xf32>
    %87 = vector.shape_cast %86 : vector<16xf32> to vector<16x1xf32>
    %cst_32 = arith.constant 1.280000e+02 : f32
    %88 = vector.broadcast %cst_32 : f32 to vector<16x1xf32>
    %89 = arith.divf %87, %88 : vector<16x1xf32>
    %cst_33 = arith.constant 9.99999974E-6 : f32
    %90 = vector.broadcast %cst_33 : f32 to vector<16x1xf32>
    %91 = arith.addf %89, %90 : vector<16x1xf32>
    %92 = math.rsqrt %91 : vector<16x1xf32>
    %93 = vector.broadcast %92 : vector<16x1xf32> to vector<16x128xf32>
    %94 = arith.mulf %84, %93 : vector<16x128xf32>
    %95 = vector.broadcast %1 : vector<1x128xf32> to vector<16x128xf32>
    %96 = arith.mulf %94, %95 : vector<16x128xf32>
    %97 = vector.broadcast %2 : vector<1x128xf32> to vector<16x128xf32>
    %98 = arith.addf %96, %97 : vector<16x128xf32>
    %99 = arith.truncf %98 : vector<16x128xf32> to vector<16x128xbf16>
    %cst_34 = arith.constant dense<0.000000e+00> : vector<16x128xf32>
    %100 = tpu.matmul %0, %99, %cst_34 {dimension_numbers = #tpu.dot_dimension_numbers<[1], [0], [0], [1], [0, 0, 1, 1], [], []>} : vector<16x16xbf16>, vector<16x128xbf16>, vector<16x128xf32> -> vector<16x128xf32>
    %101 = arith.index_cast %c0_i32 : i32 to index
    %c0_35 = arith.constant 0 : index
    %c512 = arith.constant 512 : index
    %102 = vector.load %arg2[%101, %c0_35, %c512] : memref<2x16x2048xf32, #tpu.memory_space<vmem>>, vector<1x16x128xf32>
    %103 = vector.shape_cast %102 : vector<1x16x128xf32> to vector<16x128xf32>
    %104 = vector.broadcast %5 : vector<16x1xf32> to vector<16x128xf32>
    %105 = arith.addf %100, %104 : vector<16x128xf32>
    %106 = arith.mulf %103, %105 : vector<16x128xf32>
    %107 = arith.index_cast %c0_i32 : i32 to index
    %c0_36 = arith.constant 0 : index
    %c256_37 = arith.constant 256 : index
    %108 = vector.load %arg7[%107, %c0_36, %c256_37] : memref<2x16x1024xf32, #tpu.memory_space<vmem>>, vector<1x16x128xf32>
    %109 = vector.shape_cast %108 : vector<1x16x128xf32> to vector<16x128xf32>
    %110 = vector.shape_cast %106 : vector<16x128xf32> to vector<1x16x128xf32>
    tpu.vector_store %arg7[%107, %c0_36, %c256_37], %110 {strides = array<i32>} : memref<2x16x1024xf32, #tpu.memory_space<vmem>>, vector<1x16x128xf32>,
    %111 = arith.index_cast %c0_i32 : i32 to index
    %c0_38 = arith.constant 0 : index
    %c896 = arith.constant 896 : index
    %112 = vector.load %arg2[%111, %c0_38, %c896] : memref<2x16x2048xf32, #tpu.memory_space<vmem>>, vector<1x16x128xf32>
    %113 = vector.shape_cast %112 : vector<1x16x128xf32> to vector<16x128xf32>
    %cst_39 = arith.constant dense<0.000000e+00> : vector<16xf32>
    %114 = vector.multi_reduction <add>, %113, %cst_39 [1] : vector<16x128xf32> to vector<16xf32>
    %115 = vector.shape_cast %114 : vector<16xf32> to vector<16x1xf32>
    %cst_40 = arith.constant 1.280000e+02 : f32
    %116 = vector.broadcast %cst_40 : f32 to vector<16x1xf32>
    %117 = arith.divf %115, %116 : vector<16x1xf32>
    %118 = vector.broadcast %117 : vector<16x1xf32> to vector<16x128xf32>
    %119 = arith.subf %113, %118 : vector<16x128xf32>
    %120 = arith.mulf %119, %119 : vector<16x128xf32>
    %cst_41 = arith.constant dense<0.000000e+00> : vector<16xf32>
    %121 = vector.multi_reduction <add>, %120, %cst_41 [1] : vector<16x128xf32> to vector<16xf32>
    %122 = vector.shape_cast %121 : vector<16xf32> to vector<16x1xf32>
    %cst_42 = arith.constant 1.280000e+02 : f32
    %123 = vector.broadcast %cst_42 : f32 to vector<16x1xf32>
    %124 = arith.divf %122, %123 : vector<16x1xf32>
    %cst_43 = arith.constant 9.99999974E-6 : f32
    %125 = vector.broadcast %cst_43 : f32 to vector<16x1xf32>
    %126 = arith.addf %124, %125 : vector<16x1xf32>
    %127 = math.rsqrt %126 : vector<16x1xf32>
    %128 = vector.broadcast %127 : vector<16x1xf32> to vector<16x128xf32>
    %129 = arith.mulf %119, %128 : vector<16x128xf32>
    %130 = vector.broadcast %1 : vector<1x128xf32> to vector<16x128xf32>
    %131 = arith.mulf %129, %130 : vector<16x128xf32>
    %132 = vector.broadcast %2 : vector<1x128xf32> to vector<16x128xf32>
    %133 = arith.addf %131, %132 : vector<16x128xf32>
    %134 = arith.truncf %133 : vector<16x128xf32> to vector<16x128xbf16>
    %cst_44 = arith.constant dense<0.000000e+00> : vector<16x128xf32>
    %135 = tpu.matmul %0, %134, %cst_44 {dimension_numbers = #tpu.dot_dimension_numbers<[1], [0], [0], [1], [0, 0, 1, 1], [], []>} : vector<16x16xbf16>, vector<16x128xbf16>, vector<16x128xf32> -> vector<16x128xf32>
    %136 = arith.index_cast %c0_i32 : i32 to index
    %c0_45 = arith.constant 0 : index
    %c768 = arith.constant 768 : index
    %137 = vector.load %arg2[%136, %c0_45, %c768] : memref<2x16x2048xf32, #tpu.memory_space<vmem>>, vector<1x16x128xf32>
    %138 = vector.shape_cast %137 : vector<1x16x128xf32> to vector<16x128xf32>
    %139 = vector.broadcast %5 : vector<16x1xf32> to vector<16x128xf32>
    %140 = arith.addf %135, %139 : vector<16x128xf32>
    %141 = arith.mulf %138, %140 : vector<16x128xf32>
    %142 = arith.index_cast %c0_i32 : i32 to index
    %c0_46 = arith.constant 0 : index
    %c384_47 = arith.constant 384 : index
    %143 = vector.load %arg7[%142, %c0_46, %c384_47] : memref<2x16x1024xf32, #tpu.memory_space<vmem>>, vector<1x16x128xf32>
    %144 = vector.shape_cast %143 : vector<1x16x128xf32> to vector<16x128xf32>
    %145 = vector.shape_cast %141 : vector<16x128xf32> to vector<1x16x128xf32>
    tpu.vector_store %arg7[%142, %c0_46, %c384_47], %145 {strides = array<i32>} : memref<2x16x1024xf32, #tpu.memory_space<vmem>>, vector<1x16x128xf32>,
    %146 = arith.index_cast %c0_i32 : i32 to index
    %c0_48 = arith.constant 0 : index
    %c1152 = arith.constant 1152 : index
    %147 = vector.load %arg2[%146, %c0_48, %c1152] : memref<2x16x2048xf32, #tpu.memory_space<vmem>>, vector<1x16x128xf32>
    %148 = vector.shape_cast %147 : vector<1x16x128xf32> to vector<16x128xf32>
    %cst_49 = arith.constant dense<0.000000e+00> : vector<16xf32>
    %149 = vector.multi_reduction <add>, %148, %cst_49 [1] : vector<16x128xf32> to vector<16xf32>
    %150 = vector.shape_cast %149 : vector<16xf32> to vector<16x1xf32>
    %cst_50 = arith.constant 1.280000e+02 : f32
    %151 = vector.broadcast %cst_50 : f32 to vector<16x1xf32>
    %152 = arith.divf %150, %151 : vector<16x1xf32>
    %153 = vector.broadcast %152 : vector<16x1xf32> to vector<16x128xf32>
    %154 = arith.subf %148, %153 : vector<16x128xf32>
    %155 = arith.mulf %154, %154 : vector<16x128xf32>
    %cst_51 = arith.constant dense<0.000000e+00> : vector<16xf32>
    %156 = vector.multi_reduction <add>, %155, %cst_51 [1] : vector<16x128xf32> to vector<16xf32>
    %157 = vector.shape_cast %156 : vector<16xf32> to vector<16x1xf32>
    %cst_52 = arith.constant 1.280000e+02 : f32
    %158 = vector.broadcast %cst_52 : f32 to vector<16x1xf32>
    %159 = arith.divf %157, %158 : vector<16x1xf32>
    %cst_53 = arith.constant 9.99999974E-6 : f32
    %160 = vector.broadcast %cst_53 : f32 to vector<16x1xf32>
    %161 = arith.addf %159, %160 : vector<16x1xf32>
    %162 = math.rsqrt %161 : vector<16x1xf32>
    %163 = vector.broadcast %162 : vector<16x1xf32> to vector<16x128xf32>
    %164 = arith.mulf %154, %163 : vector<16x128xf32>
    %165 = vector.broadcast %1 : vector<1x128xf32> to vector<16x128xf32>
    %166 = arith.mulf %164, %165 : vector<16x128xf32>
    %167 = vector.broadcast %2 : vector<1x128xf32> to vector<16x128xf32>
    %168 = arith.addf %166, %167 : vector<16x128xf32>
    %169 = arith.truncf %168 : vector<16x128xf32> to vector<16x128xbf16>
    %cst_54 = arith.constant dense<0.000000e+00> : vector<16x128xf32>
    %170 = tpu.matmul %0, %169, %cst_54 {dimension_numbers = #tpu.dot_dimension_numbers<[1], [0], [0], [1], [0, 0, 1, 1], [], []>} : vector<16x16xbf16>, vector<16x128xbf16>, vector<16x128xf32> -> vector<16x128xf32>
    %171 = arith.index_cast %c0_i32 : i32 to index
    %c0_55 = arith.constant 0 : index
    %c1024 = arith.constant 1024 : index
    %172 = vector.load %arg2[%171, %c0_55, %c1024] : memref<2x16x2048xf32, #tpu.memory_space<vmem>>, vector<1x16x128xf32>
    %173 = vector.shape_cast %172 : vector<1x16x128xf32> to vector<16x128xf32>
    %174 = vector.broadcast %5 : vector<16x1xf32> to vector<16x128xf32>
    %175 = arith.addf %170, %174 : vector<16x128xf32>
    %176 = arith.mulf %173, %175 : vector<16x128xf32>
    %177 = arith.index_cast %c0_i32 : i32 to index
    %c0_56 = arith.constant 0 : index
    %c512_57 = arith.constant 512 : index
    %178 = vector.load %arg7[%177, %c0_56, %c512_57] : memref<2x16x1024xf32, #tpu.memory_space<vmem>>, vector<1x16x128xf32>
    %179 = vector.shape_cast %178 : vector<1x16x128xf32> to vector<16x128xf32>
    %180 = vector.shape_cast %176 : vector<16x128xf32> to vector<1x16x128xf32>
    tpu.vector_store %arg7[%177, %c0_56, %c512_57], %180 {strides = array<i32>} : memref<2x16x1024xf32, #tpu.memory_space<vmem>>, vector<1x16x128xf32>,
    %181 = arith.index_cast %c0_i32 : i32 to index
    %c0_58 = arith.constant 0 : index
    %c1408 = arith.constant 1408 : index
    %182 = vector.load %arg2[%181, %c0_58, %c1408] : memref<2x16x2048xf32, #tpu.memory_space<vmem>>, vector<1x16x128xf32>
    %183 = vector.shape_cast %182 : vector<1x16x128xf32> to vector<16x128xf32>
    %cst_59 = arith.constant dense<0.000000e+00> : vector<16xf32>
    %184 = vector.multi_reduction <add>, %183, %cst_59 [1] : vector<16x128xf32> to vector<16xf32>
    %185 = vector.shape_cast %184 : vector<16xf32> to vector<16x1xf32>
    %cst_60 = arith.constant 1.280000e+02 : f32
    %186 = vector.broadcast %cst_60 : f32 to vector<16x1xf32>
    %187 = arith.divf %185, %186 : vector<16x1xf32>
    %188 = vector.broadcast %187 : vector<16x1xf32> to vector<16x128xf32>
    %189 = arith.subf %183, %188 : vector<16x128xf32>
    %190 = arith.mulf %189, %189 : vector<16x128xf32>
    %cst_61 = arith.constant dense<0.000000e+00> : vector<16xf32>
    %191 = vector.multi_reduction <add>, %190, %cst_61 [1] : vector<16x128xf32> to vector<16xf32>
    %192 = vector.shape_cast %191 : vector<16xf32> to vector<16x1xf32>
    %cst_62 = arith.constant 1.280000e+02 : f32
    %193 = vector.broadcast %cst_62 : f32 to vector<16x1xf32>
    %194 = arith.divf %192, %193 : vector<16x1xf32>
    %cst_63 = arith.constant 9.99999974E-6 : f32
    %195 = vector.broadcast %cst_63 : f32 to vector<16x1xf32>
    %196 = arith.addf %194, %195 : vector<16x1xf32>
    %197 = math.rsqrt %196 : vector<16x1xf32>
    %198 = vector.broadcast %197 : vector<16x1xf32> to vector<16x128xf32>
    %199 = arith.mulf %189, %198 : vector<16x128xf32>
    %200 = vector.broadcast %1 : vector<1x128xf32> to vector<16x128xf32>
    %201 = arith.mulf %199, %200 : vector<16x128xf32>
    %202 = vector.broadcast %2 : vector<1x128xf32> to vector<16x128xf32>
    %203 = arith.addf %201, %202 : vector<16x128xf32>
    %204 = arith.truncf %203 : vector<16x128xf32> to vector<16x128xbf16>
    %cst_64 = arith.constant dense<0.000000e+00> : vector<16x128xf32>
    %205 = tpu.matmul %0, %204, %cst_64 {dimension_numbers = #tpu.dot_dimension_numbers<[1], [0], [0], [1], [0, 0, 1, 1], [], []>} : vector<16x16xbf16>, vector<16x128xbf16>, vector<16x128xf32> -> vector<16x128xf32>
    %206 = arith.index_cast %c0_i32 : i32 to index
    %c0_65 = arith.constant 0 : index
    %c1280 = arith.constant 1280 : index
    %207 = vector.load %arg2[%206, %c0_65, %c1280] : memref<2x16x2048xf32, #tpu.memory_space<vmem>>, vector<1x16x128xf32>
    %208 = vector.shape_cast %207 : vector<1x16x128xf32> to vector<16x128xf32>
    %209 = vector.broadcast %5 : vector<16x1xf32> to vector<16x128xf32>
    %210 = arith.addf %205, %209 : vector<16x128xf32>
    %211 = arith.mulf %208, %210 : vector<16x128xf32>
    %212 = arith.index_cast %c0_i32 : i32 to index
    %c0_66 = arith.constant 0 : index
    %c640_67 = arith.constant 640 : index
    %213 = vector.load %arg7[%212, %c0_66, %c640_67] : memref<2x16x1024xf32, #tpu.memory_space<vmem>>, vector<1x16x128xf32>
    %214 = vector.shape_cast %213 : vector<1x16x128xf32> to vector<16x128xf32>
    %215 = vector.shape_cast %211 : vector<16x128xf32> to vector<1x16x128xf32>
    tpu.vector_store %arg7[%212, %c0_66, %c640_67], %215 {strides = array<i32>} : memref<2x16x1024xf32, #tpu.memory_space<vmem>>, vector<1x16x128xf32>,
    %216 = arith.index_cast %c0_i32 : i32 to index
    %c0_68 = arith.constant 0 : index
    %c1664 = arith.constant 1664 : index
    %217 = vector.load %arg2[%216, %c0_68, %c1664] : memref<2x16x2048xf32, #tpu.memory_space<vmem>>, vector<1x16x128xf32>
    %218 = vector.shape_cast %217 : vector<1x16x128xf32> to vector<16x128xf32>
    %cst_69 = arith.constant dense<0.000000e+00> : vector<16xf32>
    %219 = vector.multi_reduction <add>, %218, %cst_69 [1] : vector<16x128xf32> to vector<16xf32>
    %220 = vector.shape_cast %219 : vector<16xf32> to vector<16x1xf32>
    %cst_70 = arith.constant 1.280000e+02 : f32
    %221 = vector.broadcast %cst_70 : f32 to vector<16x1xf32>
    %222 = arith.divf %220, %221 : vector<16x1xf32>
    %223 = vector.broadcast %222 : vector<16x1xf32> to vector<16x128xf32>
    %224 = arith.subf %218, %223 : vector<16x128xf32>
    %225 = arith.mulf %224, %224 : vector<16x128xf32>
    %cst_71 = arith.constant dense<0.000000e+00> : vector<16xf32>
    %226 = vector.multi_reduction <add>, %225, %cst_71 [1] : vector<16x128xf32> to vector<16xf32>
    %227 = vector.shape_cast %226 : vector<16xf32> to vector<16x1xf32>
    %cst_72 = arith.constant 1.280000e+02 : f32
    %228 = vector.broadcast %cst_72 : f32 to vector<16x1xf32>
    %229 = arith.divf %227, %228 : vector<16x1xf32>
    %cst_73 = arith.constant 9.99999974E-6 : f32
    %230 = vector.broadcast %cst_73 : f32 to vector<16x1xf32>
    %231 = arith.addf %229, %230 : vector<16x1xf32>
    %232 = math.rsqrt %231 : vector<16x1xf32>
    %233 = vector.broadcast %232 : vector<16x1xf32> to vector<16x128xf32>
    %234 = arith.mulf %224, %233 : vector<16x128xf32>
    %235 = vector.broadcast %1 : vector<1x128xf32> to vector<16x128xf32>
    %236 = arith.mulf %234, %235 : vector<16x128xf32>
    %237 = vector.broadcast %2 : vector<1x128xf32> to vector<16x128xf32>
    %238 = arith.addf %236, %237 : vector<16x128xf32>
    %239 = arith.truncf %238 : vector<16x128xf32> to vector<16x128xbf16>
    %cst_74 = arith.constant dense<0.000000e+00> : vector<16x128xf32>
    %240 = tpu.matmul %0, %239, %cst_74 {dimension_numbers = #tpu.dot_dimension_numbers<[1], [0], [0], [1], [0, 0, 1, 1], [], []>} : vector<16x16xbf16>, vector<16x128xbf16>, vector<16x128xf32> -> vector<16x128xf32>
    %241 = arith.index_cast %c0_i32 : i32 to index
    %c0_75 = arith.constant 0 : index
    %c1536 = arith.constant 1536 : index
    %242 = vector.load %arg2[%241, %c0_75, %c1536] : memref<2x16x2048xf32, #tpu.memory_space<vmem>>, vector<1x16x128xf32>
    %243 = vector.shape_cast %242 : vector<1x16x128xf32> to vector<16x128xf32>
    %244 = vector.broadcast %5 : vector<16x1xf32> to vector<16x128xf32>
    %245 = arith.addf %240, %244 : vector<16x128xf32>
    %246 = arith.mulf %243, %245 : vector<16x128xf32>
    %247 = arith.index_cast %c0_i32 : i32 to index
    %c0_76 = arith.constant 0 : index
    %c768_77 = arith.constant 768 : index
    %248 = vector.load %arg7[%247, %c0_76, %c768_77] : memref<2x16x1024xf32, #tpu.memory_space<vmem>>, vector<1x16x128xf32>
    %249 = vector.shape_cast %248 : vector<1x16x128xf32> to vector<16x128xf32>
    %250 = vector.shape_cast %246 : vector<16x128xf32> to vector<1x16x128xf32>
    tpu.vector_store %arg7[%247, %c0_76, %c768_77], %250 {strides = array<i32>} : memref<2x16x1024xf32, #tpu.memory_space<vmem>>, vector<1x16x128xf32>,
    %251 = arith.index_cast %c0_i32 : i32 to index
    %c0_78 = arith.constant 0 : index
    %c1920 = arith.constant 1920 : index
    %252 = vector.load %arg2[%251, %c0_78, %c1920] : memref<2x16x2048xf32, #tpu.memory_space<vmem>>, vector<1x16x128xf32>
    %253 = vector.shape_cast %252 : vector<1x16x128xf32> to vector<16x128xf32>
    %cst_79 = arith.constant dense<0.000000e+00> : vector<16xf32>
    %254 = vector.multi_reduction <add>, %253, %cst_79 [1] : vector<16x128xf32> to vector<16xf32>
    %255 = vector.shape_cast %254 : vector<16xf32> to vector<16x1xf32>
    %cst_80 = arith.constant 1.280000e+02 : f32
    %256 = vector.broadcast %cst_80 : f32 to vector<16x1xf32>
    %257 = arith.divf %255, %256 : vector<16x1xf32>
    %258 = vector.broadcast %257 : vector<16x1xf32> to vector<16x128xf32>
    %259 = arith.subf %253, %258 : vector<16x128xf32>
    %260 = arith.mulf %259, %259 : vector<16x128xf32>
    %cst_81 = arith.constant dense<0.000000e+00> : vector<16xf32>
    %261 = vector.multi_reduction <add>, %260, %cst_81 [1] : vector<16x128xf32> to vector<16xf32>
    %262 = vector.shape_cast %261 : vector<16xf32> to vector<16x1xf32>
    %cst_82 = arith.constant 1.280000e+02 : f32
    %263 = vector.broadcast %cst_82 : f32 to vector<16x1xf32>
    %264 = arith.divf %262, %263 : vector<16x1xf32>
    %cst_83 = arith.constant 9.99999974E-6 : f32
    %265 = vector.broadcast %cst_83 : f32 to vector<16x1xf32>
    %266 = arith.addf %264, %265 : vector<16x1xf32>
    %267 = math.rsqrt %266 : vector<16x1xf32>
    %268 = vector.broadcast %267 : vector<16x1xf32> to vector<16x128xf32>
    %269 = arith.mulf %259, %268 : vector<16x128xf32>
    %270 = vector.broadcast %1 : vector<1x128xf32> to vector<16x128xf32>
    %271 = arith.mulf %269, %270 : vector<16x128xf32>
    %272 = vector.broadcast %2 : vector<1x128xf32> to vector<16x128xf32>
    %273 = arith.addf %271, %272 : vector<16x128xf32>
    %274 = arith.truncf %273 : vector<16x128xf32> to vector<16x128xbf16>
    %cst_84 = arith.constant dense<0.000000e+00> : vector<16x128xf32>
    %275 = tpu.matmul %0, %274, %cst_84 {dimension_numbers = #tpu.dot_dimension_numbers<[1], [0], [0], [1], [0, 0, 1, 1], [], []>} : vector<16x16xbf16>, vector<16x128xbf16>, vector<16x128xf32> -> vector<16x128xf32>
    %276 = arith.index_cast %c0_i32 : i32 to index
    %c0_85 = arith.constant 0 : index
    %c1792 = arith.constant 1792 : index
    %277 = vector.load %arg2[%276, %c0_85, %c1792] : memref<2x16x2048xf32, #tpu.memory_space<vmem>>, vector<1x16x128xf32>
    %278 = vector.shape_cast %277 : vector<1x16x128xf32> to vector<16x128xf32>
    %279 = vector.broadcast %5 : vector<16x1xf32> to vector<16x128xf32>
    %280 = arith.addf %275, %279 : vector<16x128xf32>
    %281 = arith.mulf %278, %280 : vector<16x128xf32>
    %282 = arith.index_cast %c0_i32 : i32 to index
    %c0_86 = arith.constant 0 : index
    %c896_87 = arith.constant 896 : index
    %283 = vector.load %arg7[%282, %c0_86, %c896_87] : memref<2x16x1024xf32, #tpu.memory_space<vmem>>, vector<1x16x128xf32>
    %284 = vector.shape_cast %283 : vector<1x16x128xf32> to vector<16x128xf32>
    %285 = vector.shape_cast %281 : vector<16x128xf32> to vector<1x16x128xf32>
    tpu.vector_store %arg7[%282, %c0_86, %c896_87], %285 {strides = array<i32>} : memref<2x16x1024xf32, #tpu.memory_space<vmem>>, vector<1x16x128xf32>,
    %c1_i32 = arith.constant 1 : i32
    %286 = arith.index_cast %c1_i32 : i32 to index
    %c0_88 = arith.constant 0 : index
    %c128_89 = arith.constant 128 : index
    %287 = vector.load %arg2[%286, %c0_88, %c128_89] : memref<2x16x2048xf32, #tpu.memory_space<vmem>>, vector<1x16x128xf32>
    %288 = vector.shape_cast %287 : vector<1x16x128xf32> to vector<16x128xf32>
    %cst_90 = arith.constant dense<0.000000e+00> : vector<16xf32>
    %289 = vector.multi_reduction <add>, %288, %cst_90 [1] : vector<16x128xf32> to vector<16xf32>
    %290 = vector.shape_cast %289 : vector<16xf32> to vector<16x1xf32>
    %cst_91 = arith.constant 1.280000e+02 : f32
    %291 = vector.broadcast %cst_91 : f32 to vector<16x1xf32>
    %292 = arith.divf %290, %291 : vector<16x1xf32>
    %293 = vector.broadcast %292 : vector<16x1xf32> to vector<16x128xf32>
    %294 = arith.subf %288, %293 : vector<16x128xf32>
    %295 = arith.mulf %294, %294 : vector<16x128xf32>
    %cst_92 = arith.constant dense<0.000000e+00> : vector<16xf32>
    %296 = vector.multi_reduction <add>, %295, %cst_92 [1] : vector<16x128xf32> to vector<16xf32>
    %297 = vector.shape_cast %296 : vector<16xf32> to vector<16x1xf32>
    %cst_93 = arith.constant 1.280000e+02 : f32
    %298 = vector.broadcast %cst_93 : f32 to vector<16x1xf32>
    %299 = arith.divf %297, %298 : vector<16x1xf32>
    %cst_94 = arith.constant 9.99999974E-6 : f32
    %300 = vector.broadcast %cst_94 : f32 to vector<16x1xf32>
    %301 = arith.addf %299, %300 : vector<16x1xf32>
    %302 = math.rsqrt %301 : vector<16x1xf32>
    %303 = vector.broadcast %302 : vector<16x1xf32> to vector<16x128xf32>
    %304 = arith.mulf %294, %303 : vector<16x128xf32>
    %305 = vector.broadcast %1 : vector<1x128xf32> to vector<16x128xf32>
    %306 = arith.mulf %304, %305 : vector<16x128xf32>
    %307 = vector.broadcast %2 : vector<1x128xf32> to vector<16x128xf32>
    %308 = arith.addf %306, %307 : vector<16x128xf32>
    %309 = arith.truncf %308 : vector<16x128xf32> to vector<16x128xbf16>
    %cst_95 = arith.constant dense<0.000000e+00> : vector<16x128xf32>
    %310 = tpu.matmul %0, %309, %cst_95 {dimension_numbers = #tpu.dot_dimension_numbers<[1], [0], [0], [1], [0, 0, 1, 1], [], []>} : vector<16x16xbf16>, vector<16x128xbf16>, vector<16x128xf32> -> vector<16x128xf32>
    %311 = arith.index_cast %c1_i32 : i32 to index
    %c0_96 = arith.constant 0 : index
    %c0_97 = arith.constant 0 : index
    %312 = vector.load %arg2[%311, %c0_96, %c0_97] : memref<2x16x2048xf32, #tpu.memory_space<vmem>>, vector<1x16x128xf32>
    %313 = vector.shape_cast %312 : vector<1x16x128xf32> to vector<16x128xf32>
    %314 = vector.broadcast %5 : vector<16x1xf32> to vector<16x128xf32>
    %315 = arith.addf %310, %314 : vector<16x128xf32>
    %316 = arith.mulf %313, %315 : vector<16x128xf32>
    %317 = arith.index_cast %c1_i32 : i32 to index
    %c0_98 = arith.constant 0 : index
    %c0_99 = arith.constant 0 : index
    %318 = vector.load %arg7[%317, %c0_98, %c0_99] : memref<2x16x1024xf32, #tpu.memory_space<vmem>>, vector<1x16x128xf32>
    %319 = vector.shape_cast %318 : vector<1x16x128xf32> to vector<16x128xf32>
    %320 = vector.shape_cast %316 : vector<16x128xf32> to vector<1x16x128xf32>
    tpu.vector_store %arg7[%317, %c0_98, %c0_99], %320 {strides = array<i32>} : memref<2x16x1024xf32, #tpu.memory_space<vmem>>, vector<1x16x128xf32>,
    %321 = arith.index_cast %c1_i32 : i32 to index
    %c0_100 = arith.constant 0 : index
    %c384_101 = arith.constant 384 : index
    %322 = vector.load %arg2[%321, %c0_100, %c384_101] : memref<2x16x2048xf32, #tpu.memory_space<vmem>>, vector<1x16x128xf32>
    %323 = vector.shape_cast %322 : vector<1x16x128xf32> to vector<16x128xf32>
    %cst_102 = arith.constant dense<0.000000e+00> : vector<16xf32>
    %324 = vector.multi_reduction <add>, %323, %cst_102 [1] : vector<16x128xf32> to vector<16xf32>
    %325 = vector.shape_cast %324 : vector<16xf32> to vector<16x1xf32>
    %cst_103 = arith.constant 1.280000e+02 : f32
    %326 = vector.broadcast %cst_103 : f32 to vector<16x1xf32>
    %327 = arith.divf %325, %326 : vector<16x1xf32>
    %328 = vector.broadcast %327 : vector<16x1xf32> to vector<16x128xf32>
    %329 = arith.subf %323, %328 : vector<16x128xf32>
    %330 = arith.mulf %329, %329 : vector<16x128xf32>
    %cst_104 = arith.constant dense<0.000000e+00> : vector<16xf32>
    %331 = vector.multi_reduction <add>, %330, %cst_104 [1] : vector<16x128xf32> to vector<16xf32>
    %332 = vector.shape_cast %331 : vector<16xf32> to vector<16x1xf32>
    %cst_105 = arith.constant 1.280000e+02 : f32
    %333 = vector.broadcast %cst_105 : f32 to vector<16x1xf32>
    %334 = arith.divf %332, %333 : vector<16x1xf32>
    %cst_106 = arith.constant 9.99999974E-6 : f32
    %335 = vector.broadcast %cst_106 : f32 to vector<16x1xf32>
    %336 = arith.addf %334, %335 : vector<16x1xf32>
    %337 = math.rsqrt %336 : vector<16x1xf32>
    %338 = vector.broadcast %337 : vector<16x1xf32> to vector<16x128xf32>
    %339 = arith.mulf %329, %338 : vector<16x128xf32>
    %340 = vector.broadcast %1 : vector<1x128xf32> to vector<16x128xf32>
    %341 = arith.mulf %339, %340 : vector<16x128xf32>
    %342 = vector.broadcast %2 : vector<1x128xf32> to vector<16x128xf32>
    %343 = arith.addf %341, %342 : vector<16x128xf32>
    %344 = arith.truncf %343 : vector<16x128xf32> to vector<16x128xbf16>
    %cst_107 = arith.constant dense<0.000000e+00> : vector<16x128xf32>
    %345 = tpu.matmul %0, %344, %cst_107 {dimension_numbers = #tpu.dot_dimension_numbers<[1], [0], [0], [1], [0, 0, 1, 1], [], []>} : vector<16x16xbf16>, vector<16x128xbf16>, vector<16x128xf32> -> vector<16x128xf32>
    %346 = arith.index_cast %c1_i32 : i32 to index
    %c0_108 = arith.constant 0 : index
    %c256_109 = arith.constant 256 : index
    %347 = vector.load %arg2[%346, %c0_108, %c256_109] : memref<2x16x2048xf32, #tpu.memory_space<vmem>>, vector<1x16x128xf32>
    %348 = vector.shape_cast %347 : vector<1x16x128xf32> to vector<16x128xf32>
    %349 = vector.broadcast %5 : vector<16x1xf32> to vector<16x128xf32>
    %350 = arith.addf %345, %349 : vector<16x128xf32>
    %351 = arith.mulf %348, %350 : vector<16x128xf32>
    %352 = arith.index_cast %c1_i32 : i32 to index
    %c0_110 = arith.constant 0 : index
    %c128_111 = arith.constant 128 : index
    %353 = vector.load %arg7[%352, %c0_110, %c128_111] : memref<2x16x1024xf32, #tpu.memory_space<vmem>>, vector<1x16x128xf32>
    %354 = vector.shape_cast %353 : vector<1x16x128xf32> to vector<16x128xf32>
    %355 = vector.shape_cast %351 : vector<16x128xf32> to vector<1x16x128xf32>
    tpu.vector_store %arg7[%352, %c0_110, %c128_111], %355 {strides = array<i32>} : memref<2x16x1024xf32, #tpu.memory_space<vmem>>, vector<1x16x128xf32>,
    %356 = arith.index_cast %c1_i32 : i32 to index
    %c0_112 = arith.constant 0 : index
    %c640_113 = arith.constant 640 : index
    %357 = vector.load %arg2[%356, %c0_112, %c640_113] : memref<2x16x2048xf32, #tpu.memory_space<vmem>>, vector<1x16x128xf32>
    %358 = vector.shape_cast %357 : vector<1x16x128xf32> to vector<16x128xf32>
    %cst_114 = arith.constant dense<0.000000e+00> : vector<16xf32>
    %359 = vector.multi_reduction <add>, %358, %cst_114 [1] : vector<16x128xf32> to vector<16xf32>
    %360 = vector.shape_cast %359 : vector<16xf32> to vector<16x1xf32>
    %cst_115 = arith.constant 1.280000e+02 : f32
    %361 = vector.broadcast %cst_115 : f32 to vector<16x1xf32>
    %362 = arith.divf %360, %361 : vector<16x1xf32>
    %363 = vector.broadcast %362 : vector<16x1xf32> to vector<16x128xf32>
    %364 = arith.subf %358, %363 : vector<16x128xf32>
    %365 = arith.mulf %364, %364 : vector<16x128xf32>
    %cst_116 = arith.constant dense<0.000000e+00> : vector<16xf32>
    %366 = vector.multi_reduction <add>, %365, %cst_116 [1] : vector<16x128xf32> to vector<16xf32>
    %367 = vector.shape_cast %366 : vector<16xf32> to vector<16x1xf32>
    %cst_117 = arith.constant 1.280000e+02 : f32
    %368 = vector.broadcast %cst_117 : f32 to vector<16x1xf32>
    %369 = arith.divf %367, %368 : vector<16x1xf32>
    %cst_118 = arith.constant 9.99999974E-6 : f32
    %370 = vector.broadcast %cst_118 : f32 to vector<16x1xf32>
    %371 = arith.addf %369, %370 : vector<16x1xf32>
    %372 = math.rsqrt %371 : vector<16x1xf32>
    %373 = vector.broadcast %372 : vector<16x1xf32> to vector<16x128xf32>
    %374 = arith.mulf %364, %373 : vector<16x128xf32>
    %375 = vector.broadcast %1 : vector<1x128xf32> to vector<16x128xf32>
    %376 = arith.mulf %374, %375 : vector<16x128xf32>
    %377 = vector.broadcast %2 : vector<1x128xf32> to vector<16x128xf32>
    %378 = arith.addf %376, %377 : vector<16x128xf32>
    %379 = arith.truncf %378 : vector<16x128xf32> to vector<16x128xbf16>
    %cst_119 = arith.constant dense<0.000000e+00> : vector<16x128xf32>
    %380 = tpu.matmul %0, %379, %cst_119 {dimension_numbers = #tpu.dot_dimension_numbers<[1], [0], [0], [1], [0, 0, 1, 1], [], []>} : vector<16x16xbf16>, vector<16x128xbf16>, vector<16x128xf32> -> vector<16x128xf32>
    %381 = arith.index_cast %c1_i32 : i32 to index
    %c0_120 = arith.constant 0 : index
    %c512_121 = arith.constant 512 : index
    %382 = vector.load %arg2[%381, %c0_120, %c512_121] : memref<2x16x2048xf32, #tpu.memory_space<vmem>>, vector<1x16x128xf32>
    %383 = vector.shape_cast %382 : vector<1x16x128xf32> to vector<16x128xf32>
    %384 = vector.broadcast %5 : vector<16x1xf32> to vector<16x128xf32>
    %385 = arith.addf %380, %384 : vector<16x128xf32>
    %386 = arith.mulf %383, %385 : vector<16x128xf32>
    %387 = arith.index_cast %c1_i32 : i32 to index
    %c0_122 = arith.constant 0 : index
    %c256_123 = arith.constant 256 : index
    %388 = vector.load %arg7[%387, %c0_122, %c256_123] : memref<2x16x1024xf32, #tpu.memory_space<vmem>>, vector<1x16x128xf32>
    %389 = vector.shape_cast %388 : vector<1x16x128xf32> to vector<16x128xf32>
    %390 = vector.shape_cast %386 : vector<16x128xf32> to vector<1x16x128xf32>
    tpu.vector_store %arg7[%387, %c0_122, %c256_123], %390 {strides = array<i32>} : memref<2x16x1024xf32, #tpu.memory_space<vmem>>, vector<1x16x128xf32>,
    %391 = arith.index_cast %c1_i32 : i32 to index
    %c0_124 = arith.constant 0 : index
    %c896_125 = arith.constant 896 : index
    %392 = vector.load %arg2[%391, %c0_124, %c896_125] : memref<2x16x2048xf32, #tpu.memory_space<vmem>>, vector<1x16x128xf32>
    %393 = vector.shape_cast %392 : vector<1x16x128xf32> to vector<16x128xf32>
    %cst_126 = arith.constant dense<0.000000e+00> : vector<16xf32>
    %394 = vector.multi_reduction <add>, %393, %cst_126 [1] : vector<16x128xf32> to vector<16xf32>
    %395 = vector.shape_cast %394 : vector<16xf32> to vector<16x1xf32>
    %cst_127 = arith.constant 1.280000e+02 : f32
    %396 = vector.broadcast %cst_127 : f32 to vector<16x1xf32>
    %397 = arith.divf %395, %396 : vector<16x1xf32>
    %398 = vector.broadcast %397 : vector<16x1xf32> to vector<16x128xf32>
    %399 = arith.subf %393, %398 : vector<16x128xf32>
    %400 = arith.mulf %399, %399 : vector<16x128xf32>
    %cst_128 = arith.constant dense<0.000000e+00> : vector<16xf32>
    %401 = vector.multi_reduction <add>, %400, %cst_128 [1] : vector<16x128xf32> to vector<16xf32>
    %402 = vector.shape_cast %401 : vector<16xf32> to vector<16x1xf32>
    %cst_129 = arith.constant 1.280000e+02 : f32
    %403 = vector.broadcast %cst_129 : f32 to vector<16x1xf32>
    %404 = arith.divf %402, %403 : vector<16x1xf32>
    %cst_130 = arith.constant 9.99999974E-6 : f32
    %405 = vector.broadcast %cst_130 : f32 to vector<16x1xf32>
    %406 = arith.addf %404, %405 : vector<16x1xf32>
    %407 = math.rsqrt %406 : vector<16x1xf32>
    %408 = vector.broadcast %407 : vector<16x1xf32> to vector<16x128xf32>
    %409 = arith.mulf %399, %408 : vector<16x128xf32>
    %410 = vector.broadcast %1 : vector<1x128xf32> to vector<16x128xf32>
    %411 = arith.mulf %409, %410 : vector<16x128xf32>
    %412 = vector.broadcast %2 : vector<1x128xf32> to vector<16x128xf32>
    %413 = arith.addf %411, %412 : vector<16x128xf32>
    %414 = arith.truncf %413 : vector<16x128xf32> to vector<16x128xbf16>
    %cst_131 = arith.constant dense<0.000000e+00> : vector<16x128xf32>
    %415 = tpu.matmul %0, %414, %cst_131 {dimension_numbers = #tpu.dot_dimension_numbers<[1], [0], [0], [1], [0, 0, 1, 1], [], []>} : vector<16x16xbf16>, vector<16x128xbf16>, vector<16x128xf32> -> vector<16x128xf32>
    %416 = arith.index_cast %c1_i32 : i32 to index
    %c0_132 = arith.constant 0 : index
    %c768_133 = arith.constant 768 : index
    %417 = vector.load %arg2[%416, %c0_132, %c768_133] : memref<2x16x2048xf32, #tpu.memory_space<vmem>>, vector<1x16x128xf32>
    %418 = vector.shape_cast %417 : vector<1x16x128xf32> to vector<16x128xf32>
    %419 = vector.broadcast %5 : vector<16x1xf32> to vector<16x128xf32>
    %420 = arith.addf %415, %419 : vector<16x128xf32>
    %421 = arith.mulf %418, %420 : vector<16x128xf32>
    %422 = arith.index_cast %c1_i32 : i32 to index
    %c0_134 = arith.constant 0 : index
    %c384_135 = arith.constant 384 : index
    %423 = vector.load %arg7[%422, %c0_134, %c384_135] : memref<2x16x1024xf32, #tpu.memory_space<vmem>>, vector<1x16x128xf32>
    %424 = vector.shape_cast %423 : vector<1x16x128xf32> to vector<16x128xf32>
    %425 = vector.shape_cast %421 : vector<16x128xf32> to vector<1x16x128xf32>
    tpu.vector_store %arg7[%422, %c0_134, %c384_135], %425 {strides = array<i32>} : memref<2x16x1024xf32, #tpu.memory_space<vmem>>, vector<1x16x128xf32>,
    %426 = arith.index_cast %c1_i32 : i32 to index
    %c0_136 = arith.constant 0 : index
    %c1152_137 = arith.constant 1152 : index
    %427 = vector.load %arg2[%426, %c0_136, %c1152_137] : memref<2x16x2048xf32, #tpu.memory_space<vmem>>, vector<1x16x128xf32>
    %428 = vector.shape_cast %427 : vector<1x16x128xf32> to vector<16x128xf32>
    %cst_138 = arith.constant dense<0.000000e+00> : vector<16xf32>
    %429 = vector.multi_reduction <add>, %428, %cst_138 [1] : vector<16x128xf32> to vector<16xf32>
    %430 = vector.shape_cast %429 : vector<16xf32> to vector<16x1xf32>
    %cst_139 = arith.constant 1.280000e+02 : f32
    %431 = vector.broadcast %cst_139 : f32 to vector<16x1xf32>
    %432 = arith.divf %430, %431 : vector<16x1xf32>
    %433 = vector.broadcast %432 : vector<16x1xf32> to vector<16x128xf32>
    %434 = arith.subf %428, %433 : vector<16x128xf32>
    %435 = arith.mulf %434, %434 : vector<16x128xf32>
    %cst_140 = arith.constant dense<0.000000e+00> : vector<16xf32>
    %436 = vector.multi_reduction <add>, %435, %cst_140 [1] : vector<16x128xf32> to vector<16xf32>
    %437 = vector.shape_cast %436 : vector<16xf32> to vector<16x1xf32>
    %cst_141 = arith.constant 1.280000e+02 : f32
    %438 = vector.broadcast %cst_141 : f32 to vector<16x1xf32>
    %439 = arith.divf %437, %438 : vector<16x1xf32>
    %cst_142 = arith.constant 9.99999974E-6 : f32
    %440 = vector.broadcast %cst_142 : f32 to vector<16x1xf32>
    %441 = arith.addf %439, %440 : vector<16x1xf32>
    %442 = math.rsqrt %441 : vector<16x1xf32>
    %443 = vector.broadcast %442 : vector<16x1xf32> to vector<16x128xf32>
    %444 = arith.mulf %434, %443 : vector<16x128xf32>
    %445 = vector.broadcast %1 : vector<1x128xf32> to vector<16x128xf32>
    %446 = arith.mulf %444, %445 : vector<16x128xf32>
    %447 = vector.broadcast %2 : vector<1x128xf32> to vector<16x128xf32>
    %448 = arith.addf %446, %447 : vector<16x128xf32>
    %449 = arith.truncf %448 : vector<16x128xf32> to vector<16x128xbf16>
    %cst_143 = arith.constant dense<0.000000e+00> : vector<16x128xf32>
    %450 = tpu.matmul %0, %449, %cst_143 {dimension_numbers = #tpu.dot_dimension_numbers<[1], [0], [0], [1], [0, 0, 1, 1], [], []>} : vector<16x16xbf16>, vector<16x128xbf16>, vector<16x128xf32> -> vector<16x128xf32>
    %451 = arith.index_cast %c1_i32 : i32 to index
    %c0_144 = arith.constant 0 : index
    %c1024_145 = arith.constant 1024 : index
    %452 = vector.load %arg2[%451, %c0_144, %c1024_145] : memref<2x16x2048xf32, #tpu.memory_space<vmem>>, vector<1x16x128xf32>
    %453 = vector.shape_cast %452 : vector<1x16x128xf32> to vector<16x128xf32>
    %454 = vector.broadcast %5 : vector<16x1xf32> to vector<16x128xf32>
    %455 = arith.addf %450, %454 : vector<16x128xf32>
    %456 = arith.mulf %453, %455 : vector<16x128xf32>
    %457 = arith.index_cast %c1_i32 : i32 to index
    %c0_146 = arith.constant 0 : index
    %c512_147 = arith.constant 512 : index
    %458 = vector.load %arg7[%457, %c0_146, %c512_147] : memref<2x16x1024xf32, #tpu.memory_space<vmem>>, vector<1x16x128xf32>
    %459 = vector.shape_cast %458 : vector<1x16x128xf32> to vector<16x128xf32>
    %460 = vector.shape_cast %456 : vector<16x128xf32> to vector<1x16x128xf32>
    tpu.vector_store %arg7[%457, %c0_146, %c512_147], %460 {strides = array<i32>} : memref<2x16x1024xf32, #tpu.memory_space<vmem>>, vector<1x16x128xf32>,
    %461 = arith.index_cast %c1_i32 : i32 to index
    %c0_148 = arith.constant 0 : index
    %c1408_149 = arith.constant 1408 : index
    %462 = vector.load %arg2[%461, %c0_148, %c1408_149] : memref<2x16x2048xf32, #tpu.memory_space<vmem>>, vector<1x16x128xf32>
    %463 = vector.shape_cast %462 : vector<1x16x128xf32> to vector<16x128xf32>
    %cst_150 = arith.constant dense<0.000000e+00> : vector<16xf32>
    %464 = vector.multi_reduction <add>, %463, %cst_150 [1] : vector<16x128xf32> to vector<16xf32>
    %465 = vector.shape_cast %464 : vector<16xf32> to vector<16x1xf32>
    %cst_151 = arith.constant 1.280000e+02 : f32
    %466 = vector.broadcast %cst_151 : f32 to vector<16x1xf32>
    %467 = arith.divf %465, %466 : vector<16x1xf32>
    %468 = vector.broadcast %467 : vector<16x1xf32> to vector<16x128xf32>
    %469 = arith.subf %463, %468 : vector<16x128xf32>
    %470 = arith.mulf %469, %469 : vector<16x128xf32>
    %cst_152 = arith.constant dense<0.000000e+00> : vector<16xf32>
    %471 = vector.multi_reduction <add>, %470, %cst_152 [1] : vector<16x128xf32> to vector<16xf32>
    %472 = vector.shape_cast %471 : vector<16xf32> to vector<16x1xf32>
    %cst_153 = arith.constant 1.280000e+02 : f32
    %473 = vector.broadcast %cst_153 : f32 to vector<16x1xf32>
    %474 = arith.divf %472, %473 : vector<16x1xf32>
    %cst_154 = arith.constant 9.99999974E-6 : f32
    %475 = vector.broadcast %cst_154 : f32 to vector<16x1xf32>
    %476 = arith.addf %474, %475 : vector<16x1xf32>
    %477 = math.rsqrt %476 : vector<16x1xf32>
    %478 = vector.broadcast %477 : vector<16x1xf32> to vector<16x128xf32>
    %479 = arith.mulf %469, %478 : vector<16x128xf32>
    %480 = vector.broadcast %1 : vector<1x128xf32> to vector<16x128xf32>
    %481 = arith.mulf %479, %480 : vector<16x128xf32>
    %482 = vector.broadcast %2 : vector<1x128xf32> to vector<16x128xf32>
    %483 = arith.addf %481, %482 : vector<16x128xf32>
    %484 = arith.truncf %483 : vector<16x128xf32> to vector<16x128xbf16>
    %cst_155 = arith.constant dense<0.000000e+00> : vector<16x128xf32>
    %485 = tpu.matmul %0, %484, %cst_155 {dimension_numbers = #tpu.dot_dimension_numbers<[1], [0], [0], [1], [0, 0, 1, 1], [], []>} : vector<16x16xbf16>, vector<16x128xbf16>, vector<16x128xf32> -> vector<16x128xf32>
    %486 = arith.index_cast %c1_i32 : i32 to index
    %c0_156 = arith.constant 0 : index
    %c1280_157 = arith.constant 1280 : index
    %487 = vector.load %arg2[%486, %c0_156, %c1280_157] : memref<2x16x2048xf32, #tpu.memory_space<vmem>>, vector<1x16x128xf32>
    %488 = vector.shape_cast %487 : vector<1x16x128xf32> to vector<16x128xf32>
    %489 = vector.broadcast %5 : vector<16x1xf32> to vector<16x128xf32>
    %490 = arith.addf %485, %489 : vector<16x128xf32>
    %491 = arith.mulf %488, %490 : vector<16x128xf32>
    %492 = arith.index_cast %c1_i32 : i32 to index
    %c0_158 = arith.constant 0 : index
    %c640_159 = arith.constant 640 : index
    %493 = vector.load %arg7[%492, %c0_158, %c640_159] : memref<2x16x1024xf32, #tpu.memory_space<vmem>>, vector<1x16x128xf32>
    %494 = vector.shape_cast %493 : vector<1x16x128xf32> to vector<16x128xf32>
    %495 = vector.shape_cast %491 : vector<16x128xf32> to vector<1x16x128xf32>
    tpu.vector_store %arg7[%492, %c0_158, %c640_159], %495 {strides = array<i32>} : memref<2x16x1024xf32, #tpu.memory_space<vmem>>, vector<1x16x128xf32>,
    %496 = arith.index_cast %c1_i32 : i32 to index
    %c0_160 = arith.constant 0 : index
    %c1664_161 = arith.constant 1664 : index
    %497 = vector.load %arg2[%496, %c0_160, %c1664_161] : memref<2x16x2048xf32, #tpu.memory_space<vmem>>, vector<1x16x128xf32>
    %498 = vector.shape_cast %497 : vector<1x16x128xf32> to vector<16x128xf32>
    %cst_162 = arith.constant dense<0.000000e+00> : vector<16xf32>
    %499 = vector.multi_reduction <add>, %498, %cst_162 [1] : vector<16x128xf32> to vector<16xf32>
    %500 = vector.shape_cast %499 : vector<16xf32> to vector<16x1xf32>
    %cst_163 = arith.constant 1.280000e+02 : f32
    %501 = vector.broadcast %cst_163 : f32 to vector<16x1xf32>
    %502 = arith.divf %500, %501 : vector<16x1xf32>
    %503 = vector.broadcast %502 : vector<16x1xf32> to vector<16x128xf32>
    %504 = arith.subf %498, %503 : vector<16x128xf32>
    %505 = arith.mulf %504, %504 : vector<16x128xf32>
    %cst_164 = arith.constant dense<0.000000e+00> : vector<16xf32>
    %506 = vector.multi_reduction <add>, %505, %cst_164 [1] : vector<16x128xf32> to vector<16xf32>
    %507 = vector.shape_cast %506 : vector<16xf32> to vector<16x1xf32>
    %cst_165 = arith.constant 1.280000e+02 : f32
    %508 = vector.broadcast %cst_165 : f32 to vector<16x1xf32>
    %509 = arith.divf %507, %508 : vector<16x1xf32>
    %cst_166 = arith.constant 9.99999974E-6 : f32
    %510 = vector.broadcast %cst_166 : f32 to vector<16x1xf32>
    %511 = arith.addf %509, %510 : vector<16x1xf32>
    %512 = math.rsqrt %511 : vector<16x1xf32>
    %513 = vector.broadcast %512 : vector<16x1xf32> to vector<16x128xf32>
    %514 = arith.mulf %504, %513 : vector<16x128xf32>
    %515 = vector.broadcast %1 : vector<1x128xf32> to vector<16x128xf32>
    %516 = arith.mulf %514, %515 : vector<16x128xf32>
    %517 = vector.broadcast %2 : vector<1x128xf32> to vector<16x128xf32>
    %518 = arith.addf %516, %517 : vector<16x128xf32>
    %519 = arith.truncf %518 : vector<16x128xf32> to vector<16x128xbf16>
    %cst_167 = arith.constant dense<0.000000e+00> : vector<16x128xf32>
    %520 = tpu.matmul %0, %519, %cst_167 {dimension_numbers = #tpu.dot_dimension_numbers<[1], [0], [0], [1], [0, 0, 1, 1], [], []>} : vector<16x16xbf16>, vector<16x128xbf16>, vector<16x128xf32> -> vector<16x128xf32>
    %521 = arith.index_cast %c1_i32 : i32 to index
    %c0_168 = arith.constant 0 : index
    %c1536_169 = arith.constant 1536 : index
    %522 = vector.load %arg2[%521, %c0_168, %c1536_169] : memref<2x16x2048xf32, #tpu.memory_space<vmem>>, vector<1x16x128xf32>
    %523 = vector.shape_cast %522 : vector<1x16x128xf32> to vector<16x128xf32>
    %524 = vector.broadcast %5 : vector<16x1xf32> to vector<16x128xf32>
    %525 = arith.addf %520, %524 : vector<16x128xf32>
    %526 = arith.mulf %523, %525 : vector<16x128xf32>
    %527 = arith.index_cast %c1_i32 : i32 to index
    %c0_170 = arith.constant 0 : index
    %c768_171 = arith.constant 768 : index
    %528 = vector.load %arg7[%527, %c0_170, %c768_171] : memref<2x16x1024xf32, #tpu.memory_space<vmem>>, vector<1x16x128xf32>
    %529 = vector.shape_cast %528 : vector<1x16x128xf32> to vector<16x128xf32>
    %530 = vector.shape_cast %526 : vector<16x128xf32> to vector<1x16x128xf32>
    tpu.vector_store %arg7[%527, %c0_170, %c768_171], %530 {strides = array<i32>} : memref<2x16x1024xf32, #tpu.memory_space<vmem>>, vector<1x16x128xf32>,
    %531 = arith.index_cast %c1_i32 : i32 to index
    %c0_172 = arith.constant 0 : index
    %c1920_173 = arith.constant 1920 : index
    %532 = vector.load %arg2[%531, %c0_172, %c1920_173] : memref<2x16x2048xf32, #tpu.memory_space<vmem>>, vector<1x16x128xf32>
    %533 = vector.shape_cast %532 : vector<1x16x128xf32> to vector<16x128xf32>
    %cst_174 = arith.constant dense<0.000000e+00> : vector<16xf32>
    %534 = vector.multi_reduction <add>, %533, %cst_174 [1] : vector<16x128xf32> to vector<16xf32>
    %535 = vector.shape_cast %534 : vector<16xf32> to vector<16x1xf32>
    %cst_175 = arith.constant 1.280000e+02 : f32
    %536 = vector.broadcast %cst_175 : f32 to vector<16x1xf32>
    %537 = arith.divf %535, %536 : vector<16x1xf32>
    %538 = vector.broadcast %537 : vector<16x1xf32> to vector<16x128xf32>
    %539 = arith.subf %533, %538 : vector<16x128xf32>
    %540 = arith.mulf %539, %539 : vector<16x128xf32>
    %cst_176 = arith.constant dense<0.000000e+00> : vector<16xf32>
    %541 = vector.multi_reduction <add>, %540, %cst_176 [1] : vector<16x128xf32> to vector<16xf32>
    %542 = vector.shape_cast %541 : vector<16xf32> to vector<16x1xf32>
    %cst_177 = arith.constant 1.280000e+02 : f32
    %543 = vector.broadcast %cst_177 : f32 to vector<16x1xf32>
    %544 = arith.divf %542, %543 : vector<16x1xf32>
    %cst_178 = arith.constant 9.99999974E-6 : f32
    %545 = vector.broadcast %cst_178 : f32 to vector<16x1xf32>
    %546 = arith.addf %544, %545 : vector<16x1xf32>
    %547 = math.rsqrt %546 : vector<16x1xf32>
    %548 = vector.broadcast %547 : vector<16x1xf32> to vector<16x128xf32>
    %549 = arith.mulf %539, %548 : vector<16x128xf32>
    %550 = vector.broadcast %1 : vector<1x128xf32> to vector<16x128xf32>
    %551 = arith.mulf %549, %550 : vector<16x128xf32>
    %552 = vector.broadcast %2 : vector<1x128xf32> to vector<16x128xf32>
    %553 = arith.addf %551, %552 : vector<16x128xf32>
    %554 = arith.truncf %553 : vector<16x128xf32> to vector<16x128xbf16>
    %cst_179 = arith.constant dense<0.000000e+00> : vector<16x128xf32>
    %555 = tpu.matmul %0, %554, %cst_179 {dimension_numbers = #tpu.dot_dimension_numbers<[1], [0], [0], [1], [0, 0, 1, 1], [], []>} : vector<16x16xbf16>, vector<16x128xbf16>, vector<16x128xf32> -> vector<16x128xf32>
    %556 = arith.index_cast %c1_i32 : i32 to index
    %c0_180 = arith.constant 0 : index
    %c1792_181 = arith.constant 1792 : index
    %557 = vector.load %arg2[%556, %c0_180, %c1792_181] : memref<2x16x2048xf32, #tpu.memory_space<vmem>>, vector<1x16x128xf32>
    %558 = vector.shape_cast %557 : vector<1x16x128xf32> to vector<16x128xf32>
    %559 = vector.broadcast %5 : vector<16x1xf32> to vector<16x128xf32>
    %560 = arith.addf %555, %559 : vector<16x128xf32>
    %561 = arith.mulf %558, %560 : vector<16x128xf32>
    %562 = arith.index_cast %c1_i32 : i32 to index
    %c0_182 = arith.constant 0 : index
    %c896_183 = arith.constant 896 : index
    %563 = vector.load %arg7[%562, %c0_182, %c896_183] : memref<2x16x1024xf32, #tpu.memory_space<vmem>>, vector<1x16x128xf32>
    %564 = vector.shape_cast %563 : vector<1x16x128xf32> to vector<16x128xf32>
    %565 = vector.shape_cast %561 : vector<16x128xf32> to vector<1x16x128xf32>
    tpu.vector_store %arg7[%562, %c0_182, %c896_183], %565 {strides = array<i32>} : memref<2x16x1024xf32, #tpu.memory_space<vmem>>, vector<1x16x128xf32>,
    %c2_i32 = arith.constant 2 : i32
    return
  }
  func.func @transform_0(%arg0: i32, %arg1: i32) -> (i32, i32, i32) {
    %c0_i32 = arith.constant 0 : i32
    %c0_i32_0 = arith.constant 0 : i32
    return %arg0, %c0_i32, %arg1 : i32, i32, i32
  }
  func.func @transform_1(%arg0: i32, %arg1: i32) -> (i32, i32) {
    %c0_i32 = arith.constant 0 : i32
    %c0_i32_0 = arith.constant 0 : i32
    %c0_i32_1 = arith.constant 0 : i32
    return %c0_i32, %c0_i32_0 : i32, i32
  }
  func.func @transform_2(%arg0: i32, %arg1: i32) -> (i32, i32) {
    %c0_i32 = arith.constant 0 : i32
    %c0_i32_0 = arith.constant 0 : i32
    %c0_i32_1 = arith.constant 0 : i32
    return %c0_i32, %c0_i32_0 : i32, i32
  }
  func.func @transform_3(%arg0: i32, %arg1: i32) -> (i32, i32) {
    %c0_i32 = arith.constant 0 : i32
    %c0_i32_0 = arith.constant 0 : i32
    %c0_i32_1 = arith.constant 0 : i32
    return %c0_i32, %c0_i32_0 : i32, i32
  }
  func.func @transform_4(%arg0: i32, %arg1: i32) -> (i32, i32) {
    %c0_i32 = arith.constant 0 : i32
    %c0_i32_0 = arith.constant 0 : i32
    %c0_i32_1 = arith.constant 0 : i32
    return %c0_i32, %c0_i32_0 : i32, i32
  }
  func.func @transform_5(%arg0: i32, %arg1: i32) -> (i32, i32, i32) {
    %c0_i32 = arith.constant 0 : i32
    %c0_i32_0 = arith.constant 0 : i32
    return %arg0, %c0_i32, %arg1 : i32, i32, i32
  }
}

</mosaic_0001>

<llo_original>
// kernel: grid_gating_unit.1
$region0: #{grid_gating_unit.1}
  #allocation0 [shape = 'u32[]', space=smem, size = 0x4, offset = 0x4, fixed_abs, tag = 'smem constant byte address 0x4 - core index']
  #allocation1 [shape = 'u32[144,128]{1,0:T(1,128)}', space=vmem, size = 0x12000, scoped, tag = 'internal scratch']
  %s0 = inlined_call_operand.vmem [shape: f32[2,16,4096], index: 0, kind: input, shape index: {}]
  %s1 = inlined_call_operand.vmem [shape: bf16[16,16], index: 1, kind: input, shape index: {}]
  %s2 = inlined_call_operand.vmem [shape: f32[16,1], index: 2, kind: input, shape index: {}]
  %s3 = inlined_call_operand.vmem [shape: f32[1,128], index: 3, kind: input, shape index: {}]
  %s4 = inlined_call_operand.vmem [shape: f32[1,128], index: 4, kind: input, shape index: {}]
  %s5 = inlined_call_operand.vmem [shape: f32[2,16,2048], index: 5, kind: output, shape index: {}]
  %s6 = sld [smem:[#allocation0]]
  $region95: #{grid_gating_unit.1} parent=0
    _
  %s8 = ssub.s32 1, %s6
  %s9 = scalar_select 0, %s8, %s6
  $region1: #{grid_gating_unit.1} parent=0
    #allocation2 [shape = 'u8[524288]{0}', space=vmem, size = 0x80000, scoped, tag = 'input window, operand 0']
    #allocation3 [shape = 'u8[262144]{0}', space=vmem, size = 0x40000, scoped, tag = 'output window, operand 0']
    loop: start=0, step=1, limit=4
    $region2: #{grid_gating_unit.1} parent=1 // loop_pre_header
      _
    $region3: #{grid_gating_unit.1} parent=1 // loop_header
      %s11 = sphi 0, %s15
      %p12 = scmp.ge.s32.totalorder %s11, 4
      %s18 = sphi 0, %s30
      %s19 = sphi 0, %s26
      %s20 = sphi 0, %s18
      %s21 = sphi 0, %s19
      %s22 = sphi 0, %s20
      %s23 = sphi 0, %s21
      %s35 = sphi 0, %s37
      %s38 = sphi 0, %s35
      %s39 = sphi 0, %s38
      %s55 = sphi 0, %s39
      %s59 = sphi 0, %s59
      %s61 = sphi 0, %s59
      %s62 = sphi 0, %s61
      %s76 = sphi 0, %s62
      %s80 = sphi 0, %s80
      %s82 = sphi 0, %s80
      %s83 = sphi 0, %s82
      %s97 = sphi 0, %s83
      %s101 = sphi 0, %s101
      %s103 = sphi 0, %s101
      %s104 = sphi 0, %s103
      %s118 = sphi 0, %s104
      %s122 = sphi 0, %s122
      %s124 = sphi 0, %s122
      %s125 = sphi 0, %s124
      %s139 = sphi 0, %s125
      %s147 = sphi 0, %s149
      %s150 = sphi 0, %s147
      %s151 = sphi 0, %s150
      %s167 = sphi 0, %s151
    $region4: #{grid_gating_unit.1} parent=1 // loop_header_branch
      %14 = sbr.rel (%p12) target = $region8
    $region5: #{grid_gating_unit.1} parent=1 // loop_body
      %s16 = ssub.s32 %s11, 1
      %s17 = ssub.s32 %s11, 2
      %s24 = sadd.s32 1, %s19
      %p25 = scmp.ge.s32.totalorder %s24, 2
      %s26 = scalar_select %p25, 0, %s24
      %s27 = sadd.s32 1, %s18
      %s28 = scalar_select %p25, %s27, %s18
      %p29 = scmp.ge.s32.totalorder %s28, 1
      %s30 = scalar_select %p29, 0, %s28
      %s31 = ssub.s32 %s18, %s30
      %s32 = ssub.s32 %s19, %s26
      %s33 = sor.u32 %s31, %s32
      %p34 = scmp.eq.s32.totalorder %s33, 0
      %s36 = sadd.s32 %s35, 1
      %s37 = scalar_select %p34, %s35, %s36
      %p40 = pneg %p34
      %p41 = scmp.eq.s32.totalorder %s11, 1
      %p42 = por %p40, %p41
      %p43 = scmp.ne.s32.totalorder %s35, %s38
      %p44 = scmp.eq.s32.totalorder %s11, 0
      %p45 = por %p43, %p44
      %p46 = scmp.ne.s32.totalorder %s35, %s38
      %p47 = scmp.eq.s32.totalorder %s16, 1
      %p48 = por %p46, %p47
      %p49 = scmp.ne.s32.totalorder %s38, %s39
      %p50 = scmp.eq.s32.totalorder %s16, 0
      %p51 = por %p49, %p50
      %p52 = scmp.ne.s32.totalorder %s38, %s39
      %p53 = scmp.eq.s32.totalorder %s17, 1
      %p54 = por %p52, %p53
      %p56 = scmp.ne.s32.totalorder %s39, %s55
      %p57 = scmp.eq.s32.totalorder %s17, 0
      %p58 = por %p56, %p57
      %s60 = sadd.s32 %s59, 1
      %p63 = scmp.eq.s32.totalorder %s11, 1
      %p64 = scmp.ne.s32.totalorder %s59, %s61
      %p65 = scmp.eq.s32.totalorder %s11, 0
      %p66 = por %p64, %p65
      %p67 = scmp.ne.s32.totalorder %s59, %s61
      %p68 = scmp.eq.s32.totalorder %s16, 1
      %p69 = por %p67, %p68
      %p70 = scmp.ne.s32.totalorder %s61, %s62
      %p71 = scmp.eq.s32.totalorder %s16, 0
      %p72 = por %p70, %p71
      %p73 = scmp.ne.s32.totalorder %s61, %s62
      %p74 = scmp.eq.s32.totalorder %s17, 1
      %p75 = por %p73, %p74
      %p77 = scmp.ne.s32.totalorder %s62, %s76
      %p78 = scmp.eq.s32.totalorder %s17, 0
      %p79 = por %p77, %p78
      %s81 = sadd.s32 %s80, 1
      %p84 = scmp.eq.s32.totalorder %s11, 1
      %p85 = scmp.ne.s32.totalorder %s80, %s82
      %p86 = scmp.eq.s32.totalorder %s11, 0
      %p87 = por %p85, %p86
      %p88 = scmp.ne.s32.totalorder %s80, %s82
      %p89 = scmp.eq.s32.totalorder %s16, 1
      %p90 = por %p88, %p89
      %p91 = scmp.ne.s32.totalorder %s82, %s83
      %p92 = scmp.eq.s32.totalorder %s16, 0
      %p93 = por %p91, %p92
      %p94 = scmp.ne.s32.totalorder %s82, %s83
      %p95 = scmp.eq.s32.totalorder %s17, 1
      %p96 = por %p94, %p95
      %p98 = scmp.ne.s32.totalorder %s83, %s97
      %p99 = scmp.eq.s32.totalorder %s17, 0
      %p100 = por %p98, %p99
      %s102 = sadd.s32 %s101, 1
      %p105 = scmp.eq.s32.totalorder %s11, 1
      %p106 = scmp.ne.s32.totalorder %s101, %s103
      %p107 = scmp.eq.s32.totalorder %s11, 0
      %p108 = por %p106, %p107
      %p109 = scmp.ne.s32.totalorder %s101, %s103
      %p110 = scmp.eq.s32.totalorder %s16, 1
      %p111 = por %p109, %p110
      %p112 = scmp.ne.s32.totalorder %s103, %s104
      %p113 = scmp.eq.s32.totalorder %s16, 0
      %p114 = por %p112, %p113
      %p115 = scmp.ne.s32.totalorder %s103, %s104
      %p116 = scmp.eq.s32.totalorder %s17, 1
      %p117 = por %p115, %p116
      %p119 = scmp.ne.s32.totalorder %s104, %s118
      %p120 = scmp.eq.s32.totalorder %s17, 0
      %p121 = por %p119, %p120
      %s123 = sadd.s32 %s122, 1
      %p126 = scmp.eq.s32.totalorder %s11, 1
      %p127 = scmp.ne.s32.totalorder %s122, %s124
      %p128 = scmp.eq.s32.totalorder %s11, 0
      %p129 = por %p127, %p128
      %p130 = scmp.ne.s32.totalorder %s122, %s124
      %p131 = scmp.eq.s32.totalorder %s16, 1
      %p132 = por %p130, %p131
      %p133 = scmp.ne.s32.totalorder %s124, %s125
      %p134 = scmp.eq.s32.totalorder %s16, 0
      %p135 = por %p133, %p134
      %p136 = scmp.ne.s32.totalorder %s124, %s125
      %p137 = scmp.eq.s32.totalorder %s17, 1
      %p138 = por %p136, %p137
      %p140 = scmp.ne.s32.totalorder %s125, %s139
      %p141 = scmp.eq.s32.totalorder %s17, 0
      %p142 = por %p140, %p141
      %s143 = ssub.s32 %s18, %s30
      %s144 = ssub.s32 %s19, %s26
      %s145 = sor.u32 %s143, %s144
      %p146 = scmp.eq.s32.totalorder %s145, 0
      %s148 = sadd.s32 %s147, 1
      %s149 = scalar_select %p146, %s147, %s148
      %p152 = pneg %p146
      %p153 = scmp.eq.s32.totalorder %s11, 1
      %p154 = por %p152, %p153
      %p155 = scmp.ne.s32.totalorder %s147, %s150
      %p156 = scmp.eq.s32.totalorder %s11, 0
      %p157 = por %p155, %p156
      %p158 = scmp.ne.s32.totalorder %s147, %s150
      %p159 = scmp.eq.s32.totalorder %s16, 1
      %p160 = por %p158, %p159
      %p161 = scmp.ne.s32.totalorder %s150, %s151
      %p162 = scmp.eq.s32.totalorder %s16, 0
      %p163 = por %p161, %p162
      %p164 = scmp.ne.s32.totalorder %s150, %s151
      %p165 = scmp.eq.s32.totalorder %s17, 1
      %p166 = por %p164, %p165
      %p168 = scmp.ne.s32.totalorder %s151, %s167
      %p169 = scmp.eq.s32.totalorder %s17, 0
      %p170 = por %p168, %p169
      %p171 = scmp.le.s32.totalorder 1, %s11
      %p172 = scmp.lt.s32.totalorder %s11, 3
      %p173 = pnand %p171, %p172
      %p174 = pneg %p173
      // Predicated region
      $region9: #{grid_gating_unit.1} parent=5 // pred_check
        _
      $region10: #{grid_gating_unit.1} parent=5 // pred_check_branch
        %176 = sbr.rel (%p173) target = $region12
      $region11: #{grid_gating_unit.1} parent=5 // pred_region
        %s177 = ssub.s32 %s11, 1
        // Predicated region
        $region13: #{grid_gating_unit.1} parent=11 // pred_check
          %p178 = pneg %p72
        $region14: #{grid_gating_unit.1} parent=11 // pred_check_branch
          %180 = sbr.rel (%p178) target = $region16
        $region15: #{grid_gating_unit.1} parent=11 // pred_region
          _
        $region16: #{grid_gating_unit.1} parent=11 // pred_fallthru
          _
        // Predicated region
        $region17: #{grid_gating_unit.1} parent=11 // pred_check
          %p181 = pneg %p93
        $region18: #{grid_gating_unit.1} parent=11 // pred_check_branch
          %183 = sbr.rel (%p181) target = $region20
        $region19: #{grid_gating_unit.1} parent=11 // pred_region
          _
        $region20: #{grid_gating_unit.1} parent=11 // pred_fallthru
          _
        // Predicated region
        $region21: #{grid_gating_unit.1} parent=11 // pred_check
          %p184 = pneg %p114
        $region22: #{grid_gating_unit.1} parent=11 // pred_check_branch
          %186 = sbr.rel (%p184) target = $region24
        $region23: #{grid_gating_unit.1} parent=11 // pred_region
          _
        $region24: #{grid_gating_unit.1} parent=11 // pred_fallthru
          _
        // Predicated region
        $region25: #{grid_gating_unit.1} parent=11 // pred_check
          %p187 = pneg %p135
        $region26: #{grid_gating_unit.1} parent=11 // pred_check_branch
          %189 = sbr.rel (%p187) target = $region28
        $region27: #{grid_gating_unit.1} parent=11 // pred_region
          _
        $region28: #{grid_gating_unit.1} parent=11 // pred_fallthru
          _
      $region12: #{grid_gating_unit.1} parent=5 // pred_fallthru
        _
      %p190 = scmp.lt.s32.totalorder %s11, 2
      // Predicated region
      $region29: #{grid_gating_unit.1} parent=5 // pred_check
        %p191 = pneg %p190
      $region30: #{grid_gating_unit.1} parent=5 // pred_check_branch
        %193 = sbr.rel (%p191) target = $region32
      $region31: #{grid_gating_unit.1} parent=5 // pred_region
        // Predicated region
        $region33: #{grid_gating_unit.1} parent=31 // pred_check
          %p194 = pneg %p45
        $region34: #{grid_gating_unit.1} parent=31 // pred_check_branch
          %196 = sbr.rel (%p194) target = $region36
        $region35: #{grid_gating_unit.1} parent=31 // pred_region
          %s197 = sand.u32 %s35, 1
          %s198 = sand.u32 %s35, 1
          %s199 = smul.addr %s198, 512
          %s200 = scalar_lea.vmem [#allocation2], %s199
          %s201 = smul.u32 2, %s18
          %s202 = smul.u32 16, %s19
          %s203 = smul.addr %s201, 64
          %s204 = sadd.s32 %s202, %s203
          %s205 = smul.addr %s204, 8
          %s206 = scalar_lea.vmem %s0, %s205
          // Predicated region
          $region37: #{grid_gating_unit.1} parent=35 // pred_check
            _
          $region38: #{grid_gating_unit.1} parent=35 // pred_check_branch
            %208 = sbr.rel (0) target = $region40
          $region39: #{grid_gating_unit.1} parent=35 // pred_region
            // Predicated region
            $region41: #{grid_gating_unit.1} parent=39 // pred_check
              _
            $region42: #{grid_gating_unit.1} parent=39 // pred_check_branch
              %210 = sbr.rel (0) target = $region44
            $region43: #{grid_gating_unit.1} parent=39 // pred_region
              loop: start=0, step=1, limit=1
              $region45: #{grid_gating_unit.1} parent=43 // loop_pre_header
                _
              $region46: #{grid_gating_unit.1} parent=43 // loop_header
                %s212 = sphi 0, %s216
                %p213 = scmp.ge.s32.totalorder %s212, 1
                %s217 = sphi %s206, %s206
                %s218 = sphi %s200, %s200
              $region47: #{grid_gating_unit.1} parent=43 // loop_header_branch
                %215 = sbr.rel (%p213) target = $region51
              $region48: #{grid_gating_unit.1} parent=43 // loop_body
                %v219 = vld [vmem:[%s217] sm:$0xff]
                %220 = vst [vmem:[%s218] sm:$0xff] %v219
                %v221 = vld [vmem:[%s217 + $0x8] sm:$0xff]
                %222 = vst [vmem:[%s218 + $0x8] sm:$0xff] %v221
                %v223 = vld [vmem:[%s217 + $0x10] sm:$0xff]
                %224 = vst [vmem:[%s218 + $0x10] sm:$0xff] %v223
                %v225 = vld [vmem:[%s217 + $0x18] sm:$0xff]
                %226 = vst [vmem:[%s218 + $0x18] sm:$0xff] %v225
                %v227 = vld [vmem:[%s217 + $0x20] sm:$0xff]
                %228 = vst [vmem:[%s218 + $0x20] sm:$0xff] %v227
                %v229 = vld [vmem:[%s217 + $0x28] sm:$0xff]
                %230 = vst [vmem:[%s218 + $0x28] sm:$0xff] %v229
                %v231 = vld [vmem:[%s217 + $0x30] sm:$0xff]
                %232 = vst [vmem:[%s218 + $0x30] sm:$0xff] %v231
                %v233 = vld [vmem:[%s217 + $0x38] sm:$0xff]
                %234 = vst [vmem:[%s218 + $0x38] sm:$0xff] %v233
                %v235 = vld [vmem:[%s217 + $0x40] sm:$0xff]
                %236 = vst [vmem:[%s218 + $0x40] sm:$0xff] %v235
                %v237 = vld [vmem:[%s217 + $0x48] sm:$0xff]
                %238 = vst [vmem:[%s218 + $0x48] sm:$0xff] %v237
                %v239 = vld [vmem:[%s217 + $0x50] sm:$0xff]
                %240 = vst [vmem:[%s218 + $0x50] sm:$0xff] %v239
                %v241 = vld [vmem:[%s217 + $0x58] sm:$0xff]
                %242 = vst [vmem:[%s218 + $0x58] sm:$0xff] %v241
                %v243 = vld [vmem:[%s217 + $0x60] sm:$0xff]
                %244 = vst [vmem:[%s218 + $0x60] sm:$0xff] %v243
                %v245 = vld [vmem:[%s217 + $0x68] sm:$0xff]
                %246 = vst [vmem:[%s218 + $0x68] sm:$0xff] %v245
                %v247 = vld [vmem:[%s217 + $0x70] sm:$0xff]
                %248 = vst [vmem:[%s218 + $0x70] sm:$0xff] %v247
                %v249 = vld [vmem:[%s217 + $0x78] sm:$0xff]
                %250 = vst [vmem:[%s218 + $0x78] sm:$0xff] %v249
                %v251 = vld [vmem:[%s217 + $0x100] sm:$0xff]
                %252 = vst [vmem:[%s218 + $0x80] sm:$0xff] %v251
                %v253 = vld [vmem:[%s217 + $0x108] sm:$0xff]
                %254 = vst [vmem:[%s218 + $0x88] sm:$0xff] %v253
                %v255 = vld [vmem:[%s217 + $0x110] sm:$0xff]
                %256 = vst [vmem:[%s218 + $0x90] sm:$0xff] %v255
                %v257 = vld [vmem:[%s217 + $0x118] sm:$0xff]
                %258 = vst [vmem:[%s218 + $0x98] sm:$0xff] %v257
                %v259 = vld [vmem:[%s217 + $0x120] sm:$0xff]
                %260 = vst [vmem:[%s218 + $0xa0] sm:$0xff] %v259
                %v261 = vld [vmem:[%s217 + $0x128] sm:$0xff]
                %262 = vst [vmem:[%s218 + $0xa8] sm:$0xff] %v261
                %v263 = vld [vmem:[%s217 + $0x130] sm:$0xff]
                %264 = vst [vmem:[%s218 + $0xb0] sm:$0xff] %v263
                %v265 = vld [vmem:[%s217 + $0x138] sm:$0xff]
                %266 = vst [vmem:[%s218 + $0xb8] sm:$0xff] %v265
                %v267 = vld [vmem:[%s217 + $0x140] sm:$0xff]
                %268 = vst [vmem:[%s218 + $0xc0] sm:$0xff] %v267
                %v269 = vld [vmem:[%s217 + $0x148] sm:$0xff]
                %270 = vst [vmem:[%s218 + $0xc8] sm:$0xff] %v269
                %v271 = vld [vmem:[%s217 + $0x150] sm:$0xff]
                %272 = vst [vmem:[%s218 + $0xd0] sm:$0xff] %v271
                %v273 = vld [vmem:[%s217 + $0x158] sm:$0xff]
                %274 = vst [vmem:[%s218 + $0xd8] sm:$0xff] %v273
                %v275 = vld [vmem:[%s217 + $0x160] sm:$0xff]
                %276 = vst [vmem:[%s218 + $0xe0] sm:$0xff] %v275
                %v277 = vld [vmem:[%s217 + $0x168] sm:$0xff]
                %278 = vst [vmem:[%s218 + $0xe8] sm:$0xff] %v277
                %v279 = vld [vmem:[%s217 + $0x170] sm:$0xff]
                %280 = vst [vmem:[%s218 + $0xf0] sm:$0xff] %v279
                %v281 = vld [vmem:[%s217 + $0x178] sm:$0xff]
                %282 = vst [vmem:[%s218 + $0xf8] sm:$0xff] %v281
                %v283 = vld [vmem:[%s217 + $0x200] sm:$0xff]
                %284 = vst [vmem:[%s218 + $0x100] sm:$0xff] %v283
                %v285 = vld [vmem:[%s217 + $0x208] sm:$0xff]
                %286 = vst [vmem:[%s218 + $0x108] sm:$0xff] %v285
                %v287 = vld [vmem:[%s217 + $0x210] sm:$0xff]
                %288 = vst [vmem:[%s218 + $0x110] sm:$0xff] %v287
                %v289 = vld [vmem:[%s217 + $0x218] sm:$0xff]
                %290 = vst [vmem:[%s218 + $0x118] sm:$0xff] %v289
                %v291 = vld [vmem:[%s217 + $0x220] sm:$0xff]
                %292 = vst [vmem:[%s218 + $0x120] sm:$0xff] %v291
                %v293 = vld [vmem:[%s217 + $0x228] sm:$0xff]
                %294 = vst [vmem:[%s218 + $0x128] sm:$0xff] %v293
                %v295 = vld [vmem:[%s217 + $0x230] sm:$0xff]
                %296 = vst [vmem:[%s218 + $0x130] sm:$0xff] %v295
                %v297 = vld [vmem:[%s217 + $0x238] sm:$0xff]
                %298 = vst [vmem:[%s218 + $0x138] sm:$0xff] %v297
                %v299 = vld [vmem:[%s217 + $0x240] sm:$0xff]
                %300 = vst [vmem:[%s218 + $0x140] sm:$0xff] %v299
                %v301 = vld [vmem:[%s217 + $0x248] sm:$0xff]
                %302 = vst [vmem:[%s218 + $0x148] sm:$0xff] %v301
                %v303 = vld [vmem:[%s217 + $0x250] sm:$0xff]
                %304 = vst [vmem:[%s218 + $0x150] sm:$0xff] %v303
                %v305 = vld [vmem:[%s217 + $0x258] sm:$0xff]
                %306 = vst [vmem:[%s218 + $0x158] sm:$0xff] %v305
                %v307 = vld [vmem:[%s217 + $0x260] sm:$0xff]
                %308 = vst [vmem:[%s218 + $0x160] sm:$0xff] %v307
                %v309 = vld [vmem:[%s217 + $0x268] sm:$0xff]
                %310 = vst [vmem:[%s218 + $0x168] sm:$0xff] %v309
                %v311 = vld [vmem:[%s217 + $0x270] sm:$0xff]
                %312 = vst [vmem:[%s218 + $0x170] sm:$0xff] %v311
                %v313 = vld [vmem:[%s217 + $0x278] sm:$0xff]
                %314 = vst [vmem:[%s218 + $0x178] sm:$0xff] %v313
                %v315 = vld [vmem:[%s217 + $0x300] sm:$0xff]
                %316 = vst [vmem:[%s218 + $0x180] sm:$0xff] %v315
                %v317 = vld [vmem:[%s217 + $0x308] sm:$0xff]
                %318 = vst [vmem:[%s218 + $0x188] sm:$0xff] %v317
                %v319 = vld [vmem:[%s217 + $0x310] sm:$0xff]
                %320 = vst [vmem:[%s218 + $0x190] sm:$0xff] %v319
                %v321 = vld [vmem:[%s217 + $0x318] sm:$0xff]
                %322 = vst [vmem:[%s218 + $0x198] sm:$0xff] %v321
                %v323 = vld [vmem:[%s217 + $0x320] sm:$0xff]
                %324 = vst [vmem:[%s218 + $0x1a0] sm:$0xff] %v323
                %v325 = vld [vmem:[%s217 + $0x328] sm:$0xff]
                %326 = vst [vmem:[%s218 + $0x1a8] sm:$0xff] %v325
                %v327 = vld [vmem:[%s217 + $0x330] sm:$0xff]
                %328 = vst [vmem:[%s218 + $0x1b0] sm:$0xff] %v327
                %v329 = vld [vmem:[%s217 + $0x338] sm:$0xff]
                %330 = vst [vmem:[%s218 + $0x1b8] sm:$0xff] %v329
                %v331 = vld [vmem:[%s217 + $0x340] sm:$0xff]
                %332 = vst [vmem:[%s218 + $0x1c0] sm:$0xff] %v331
                %v333 = vld [vmem:[%s217 + $0x348] sm:$0xff]
                %334 = vst [vmem:[%s218 + $0x1c8] sm:$0xff] %v333
                %v335 = vld [vmem:[%s217 + $0x350] sm:$0xff]
                %336 = vst [vmem:[%s218 + $0x1d0] sm:$0xff] %v335
                %v337 = vld [vmem:[%s217 + $0x358] sm:$0xff]
                %338 = vst [vmem:[%s218 + $0x1d8] sm:$0xff] %v337
                %v339 = vld [vmem:[%s217 + $0x360] sm:$0xff]
                %340 = vst [vmem:[%s218 + $0x1e0] sm:$0xff] %v339
                %v341 = vld [vmem:[%s217 + $0x368] sm:$0xff]
                %342 = vst [vmem:[%s218 + $0x1e8] sm:$0xff] %v341
                %v343 = vld [vmem:[%s217 + $0x370] sm:$0xff]
                %344 = vst [vmem:[%s218 + $0x1f0] sm:$0xff] %v343
                %v345 = vld [vmem:[%s217 + $0x378] sm:$0xff]
                %346 = vst [vmem:[%s218 + $0x1f8] sm:$0xff] %v345
              $region49: #{grid_gating_unit.1} parent=43 // loop_footer
                %s216 = sadd.s32 1, %s212
              $region50: #{grid_gating_unit.1} parent=43 // loop_footer_branch
                %211 = sbr.rel target = $region46
              $region51: #{grid_gating_unit.1} parent=43 // loop_exit
                _
            $region44: #{grid_gating_unit.1} parent=39 // pred_fallthru
              _
            // Predicated region
            $region52: #{grid_gating_unit.1} parent=39 // pred_check
              _
            $region53: #{grid_gating_unit.1} parent=39 // pred_check_branch
              %348 = sbr.rel target = $region55
            $region54: #{grid_gating_unit.1} parent=39 // pred_region
              _
            $region55: #{grid_gating_unit.1} parent=39 // pred_fallthru
              _
          $region40: #{grid_gating_unit.1} parent=35 // pred_fallthru
            _
          %349 = vnop
        $region36: #{grid_gating_unit.1} parent=31 // pred_fallthru
          _
      $region32: #{grid_gating_unit.1} parent=5 // pred_fallthru
        _
      %p350 = scmp.le.s32.totalorder 1, %s11
      %p351 = scmp.lt.s32.totalorder %s11, 3
      %p352 = pnand %p350, %p351
      %p353 = pneg %p352
      // Predicated region
      $region56: #{grid_gating_unit.1} parent=5 // pred_check
        _
      $region57: #{grid_gating_unit.1} parent=5 // pred_check_branch
        %355 = sbr.rel (%p352) target = $region59
      $region58: #{grid_gating_unit.1} parent=5 // pred_region
        %s356 = ssub.s32 %s11, 1
        %s357 = sand.u32 %s38, 1
        %s358 = sand.u32 %s38, 1
        %s359 = smul.addr %s358, 512
        %s360 = scalar_lea.vmem [#allocation2], %s359
        // Predicated region
        $region60: #{grid_gating_unit.1} parent=58 // pred_check
          %p361 = pneg %p51
        $region61: #{grid_gating_unit.1} parent=58 // pred_check_branch
          %363 = sbr.rel (%p361) target = $region63
        $region62: #{grid_gating_unit.1} parent=58 // pred_region
          _
        $region63: #{grid_gating_unit.1} parent=58 // pred_fallthru
          _
        %s364 = sand.u32 %s38, 1
        %s365 = sand.u32 %s38, 1
        %s366 = smul.addr %s365, 512
        %s367 = scalar_lea.vmem [#allocation2], %s366
        %p368 = pneg %p51
        %p369 = pneg %p48
        %p370 = pneg %p72
        %p371 = pneg %p69
        %p372 = pneg %p93
        %p373 = pneg %p90
        %p374 = pneg %p114
        %p375 = pneg %p111
        %p376 = pneg %p135
        %p377 = pneg %p132
        %p378 = pneg %p163
        %p379 = pneg %p160
        %s380 = sand.u32 %s150, 1
        %s381 = sand.u32 %s150, 1
        %s382 = smul.addr %s381, 256
        %s383 = scalar_lea.vmem [#allocation3], %s382
        %s384 = smul.u32 2, %s20
        %s385 = smul.u32 16, %s21
        %s386 = smul.u32 2, %s20
        %s387 = smul.u32 8, %s21
        %v389 = vld [vmem:[%s1] sm:$0xf]
        %v390 = vld [vmem:[%s1 + $0x4] sm:$0xf]
        %v391 = vld [vmem:[%s3] sm:$0x1]
        %v392 = vld [vmem:[%s4] sm:$0x1]
        %v393 = vld [vmem:[%s2] sm:$0xff]
        %v394 = vld [vmem:[%s2 + $0x8] sm:$0xff]
        %v395 = vadd.f32 %v393, 1.0
        %v396 = vadd.f32 %v394, 1.0
        %v397 = vld [vmem:[%s360 + $0x8] sm:$0xff]
        %v398 = vld [vmem:[%s360 + $0x88] sm:$0xff]
        %399 = vadd.xlane.f32.xlu0 %v397
        %v400 = vpop.xlane.xlu0 %399
        %401 = vadd.xlane.f32.xlu0 %v398
        %v402 = vpop.xlane.xlu0 %401
        %v403 = vrcp.pop 128.0
        %v404 = vmul.f32 %v400, %v403
        %v405 = vmul.f32 %v402, %v403
        %v406 = vsub.f32 %v397, %v404
        %v407 = vsub.f32 %v398, %v405
        %v408 = vmul.f32 %v406, %v406
        %v409 = vmul.f32 %v407, %v407
        %410 = vadd.xlane.f32.xlu0 %v408
        %v411 = vpop.xlane.xlu0 %410
        %412 = vadd.xlane.f32.xlu0 %v409
        %v413 = vpop.xlane.xlu0 %412
        %v414 = vmul.f32 %v411, %v403
        %v415 = vmul.f32 %v413, %v403
        %v416 = vadd.f32 %v414, 1e-05
        %v417 = vadd.f32 %v415, 1e-05
        %v418 = vrsqrt.pop %v416
        %v419 = vrsqrt.pop %v417
        %v420 = vmul.f32 %v406, %v418
        %v421 = vmul.f32 %v407, %v419
        %v423 = vlaneseq
        %v424 = vshrl.u32 %v423, 7
        %v425 = vsub.s32 0, %v424
        %v426 = vrot.slane %v391, %v425
        %v428 = vmul.f32 %v420, %v426
        %v429 = vmul.f32 %v421, %v426
        %v431 = vlaneseq
        %v432 = vshrl.u32 %v431, 7
        %v433 = vsub.s32 0, %v432
        %v434 = vrot.slane %v392, %v433
        %v436 = vadd.f32 %v428, %v434
        %v437 = vadd.f32 %v429, %v434
        %v438 = vpack.c.bf16 %v437, %v436
        %v439 = vld [vmem:[%s360] sm:$0xff]
        %v440 = vld [vmem:[%s360 + $0x80] sm:$0xff]
        %442 = vset.pattern.permute.xlu0 0
        %443 = vperm.xlu0 %442, %v395
        %v444 = vpop.permute.xlu0 %443
        %447 = vset.pattern.permute.xlu0 0
        %448 = vperm.xlu0 %447, %v396
        %v449 = vpop.permute.xlu0 %448
        %v453 = vunpack.c.l.b16 %v389
        %v454 = vunpack.c.l.b16 %v390
        %v455 = vpack.c.b16 %v454, %v453
        %vm456 = vcmask 130048
        %v458 = vsel %vm456, %v455, 0
        %460 = vmatprep.subr.bf16.mxu0 0
        %461 = vmatpush1.bf16.msra.mxu0 0
        %462 = vmatprep.subr.bf16.mxu0 0
        %463 = vmatpush1.bf16.msra.mxu0 0
        %464 = vmatprep.subr.bf16.mxu0 0
        %465 = vmatpush1.bf16.msra.mxu0 0
        %466 = vmatprep.subr.bf16.mxu0 0
        %467 = vmatpush1.bf16.msra.mxu0 0
        %468 = vmatprep.subr.bf16.mxu0 0
        %469 = vmatpush1.bf16.msra.mxu0 0
        %470 = vmatprep.subr.bf16.mxu0 0
        %471 = vmatpush1.bf16.msra.mxu0 0
        %472 = vmatprep.subr.bf16.mxu0 0
        %473 = vmatpush1.bf16.msra.mxu0 0
        %474 = vmatprep.subr.bf16.mxu0 0
        %475 = vmatpush1.bf16.msra.mxu0 %v438
        %476 = vmatprep.subr.bf16.mxu0 0
        %477 = vmatpush2.bf16.msra.mxu0 0
        %478 = vmatprep.subr.bf16.mxu0 0
        %479 = vmatpush2.bf16.msra.mxu0 0
        %480 = vmatprep.subr.bf16.mxu0 0
        %481 = vmatpush2.bf16.msra.mxu0 0
        %482 = vmatprep.subr.bf16.mxu0 0
        %483 = vmatpush2.bf16.msra.mxu0 0
        %484 = vmatprep.subr.bf16.mxu0 0
        %485 = vmatpush2.bf16.msra.mxu0 0
        %486 = vmatprep.subr.bf16.mxu0 0
        %487 = vmatpush2.bf16.msra.mxu0 0
        %488 = vmatprep.subr.bf16.mxu0 0
        %489 = vmatpush2.bf16.msra.mxu0 0
        %490 = vmatprep.subr.bf16.mxu0 0
        %491 = vmatpush2.bf16.msra.mxu0 0
        %492 = vmatprep.mubr.bf16.mxu0 0
        %493 = vmatmul.mubr.bf16.gmra.mxu0 %v458
        %v494 = vpop.f32.mrf.mxu0
        %v495 = vadd.f32 %v444, %v494
        %v496 = vpop.f32.mrf.mxu0
        %v497 = vpop.f32.mrf.mxu0
        %v498 = vadd.f32 %v449, %v497
        %v499 = vpop.f32.mrf.mxu0
        %500 = vdwg.mxu0
        %v501 = vmul.f32 %v439, %v495
        %v502 = vmul.f32 %v440, %v498
        %503 = vst [vmem:[%s383] sm:$0xff] %v501
        %504 = vst [vmem:[%s383 + $0x40] sm:$0xff] %v502
        %v505 = vld [vmem:[%s360 + $0x18] sm:$0xff]
        %v506 = vld [vmem:[%s360 + $0x98] sm:$0xff]
        %507 = vadd.xlane.f32.xlu0 %v505
        %v508 = vpop.xlane.xlu0 %507
        %509 = vadd.xlane.f32.xlu0 %v506
        %v510 = vpop.xlane.xlu0 %509
        %v511 = vmul.f32 %v508, %v403
        %v512 = vmul.f32 %v510, %v403
        %v513 = vsub.f32 %v505, %v511
        %v514 = vsub.f32 %v506, %v512
        %v515 = vmul.f32 %v513, %v513
        %v516 = vmul.f32 %v514, %v514
        %517 = vadd.xlane.f32.xlu0 %v515
        %v518 = vpop.xlane.xlu0 %517
        %519 = vadd.xlane.f32.xlu0 %v516
        %v520 = vpop.xlane.xlu0 %519
        %v521 = vmul.f32 %v518, %v403
        %v522 = vmul.f32 %v520, %v403
        %v523 = vadd.f32 %v521, 1e-05
        %v524 = vadd.f32 %v522, 1e-05
        %v525 = vrsqrt.pop %v523
        %v526 = vrsqrt.pop %v524
        %v527 = vmul.f32 %v513, %v525
        %v528 = vmul.f32 %v514, %v526
        %v529 = vmul.f32 %v527, %v426
        %v530 = vmul.f32 %v528, %v426
        %v531 = vadd.f32 %v529, %v434
        %v532 = vadd.f32 %v530, %v434
        %v533 = vpack.c.bf16 %v532, %v531
        %v534 = vld [vmem:[%s360 + $0x10] sm:$0xff]
        %v535 = vld [vmem:[%s360 + $0x90] sm:$0xff]
        %536 = vmatprep.subr.bf16.mxu0 0
        %537 = vmatpush1.bf16.msra.mxu0 0
        %538 = vmatprep.subr.bf16.mxu0 0
        %539 = vmatpush1.bf16.msra.mxu0 0
        %540 = vmatprep.subr.bf16.mxu0 0
        %541 = vmatpush1.bf16.msra.mxu0 0
        %542 = vmatprep.subr.bf16.mxu0 0
        %543 = vmatpush1.bf16.msra.mxu0 0
        %544 = vmatprep.subr.bf16.mxu0 0
        %545 = vmatpush1.bf16.msra.mxu0 0
        %546 = vmatprep.subr.bf16.mxu0 0
        %547 = vmatpush1.bf16.msra.mxu0 0
        %548 = vmatprep.subr.bf16.mxu0 0
        %549 = vmatpush1.bf16.msra.mxu0 0
        %550 = vmatprep.subr.bf16.mxu0 0
        %551 = vmatpush1.bf16.msra.mxu0 %v533
        %552 = vmatprep.subr.bf16.mxu0 0
        %553 = vmatpush2.bf16.msra.mxu0 0
        %554 = vmatprep.subr.bf16.mxu0 0
        %555 = vmatpush2.bf16.msra.mxu0 0
        %556 = vmatprep.subr.bf16.mxu0 0
        %557 = vmatpush2.bf16.msra.mxu0 0
        %558 = vmatprep.subr.bf16.mxu0 0
        %559 = vmatpush2.bf16.msra.mxu0 0
        %560 = vmatprep.subr.bf16.mxu0 0
        %561 = vmatpush2.bf16.msra.mxu0 0
        %562 = vmatprep.subr.bf16.mxu0 0
        %563 = vmatpush2.bf16.msra.mxu0 0
        %564 = vmatprep.subr.bf16.mxu0 0
        %565 = vmatpush2.bf16.msra.mxu0 0
        %566 = vmatprep.subr.bf16.mxu0 0
        %567 = vmatpush2.bf16.msra.mxu0 0
        %568 = vmatprep.mubr.bf16.mxu0 0
        %569 = vmatmul.mubr.bf16.gmra.mxu0 %v458
        %v570 = vpop.f32.mrf.mxu0
        %v571 = vadd.f32 %v444, %v570
        %v572 = vpop.f32.mrf.mxu0
        %v573 = vpop.f32.mrf.mxu0
        %v574 = vadd.f32 %v449, %v573
        %v575 = vpop.f32.mrf.mxu0
        %576 = vdwg.mxu0
        %v577 = vmul.f32 %v534, %v571
        %v578 = vmul.f32 %v535, %v574
        %579 = vst [vmem:[%s383 + $0x8] sm:$0xff] %v577
        %580 = vst [vmem:[%s383 + $0x48] sm:$0xff] %v578
        %v581 = vld [vmem:[%s360 + $0x28] sm:$0xff]
        %v582 = vld [vmem:[%s360 + $0xa8] sm:$0xff]
        %583 = vadd.xlane.f32.xlu0 %v581
        %v584 = vpop.xlane.xlu0 %583
        %585 = vadd.xlane.f32.xlu0 %v582
        %v586 = vpop.xlane.xlu0 %585
        %v587 = vmul.f32 %v584, %v403
        %v588 = vmul.f32 %v586, %v403
        %v589 = vsub.f32 %v581, %v587
        %v590 = vsub.f32 %v582, %v588
        %v591 = vmul.f32 %v589, %v589
        %v592 = vmul.f32 %v590, %v590
        %593 = vadd.xlane.f32.xlu0 %v591
        %v594 = vpop.xlane.xlu0 %593
        %595 = vadd.xlane.f32.xlu0 %v592
        %v596 = vpop.xlane.xlu0 %595
        %v597 = vmul.f32 %v594, %v403
        %v598 = vmul.f32 %v596, %v403
        %v599 = vadd.f32 %v597, 1e-05
        %v600 = vadd.f32 %v598, 1e-05
        %v601 = vrsqrt.pop %v599
        %v602 = vrsqrt.pop %v600
        %v603 = vmul.f32 %v589, %v601
        %v604 = vmul.f32 %v590, %v602
        %v605 = vmul.f32 %v603, %v426
        %v606 = vmul.f32 %v604, %v426
        %v607 = vadd.f32 %v605, %v434
        %v608 = vadd.f32 %v606, %v434
        %v609 = vpack.c.bf16 %v608, %v607
        %v610 = vld [vmem:[%s360 + $0x20] sm:$0xff]
        %v611 = vld [vmem:[%s360 + $0xa0] sm:$0xff]
        %612 = vmatprep.subr.bf16.mxu0 0
        %613 = vmatpush1.bf16.msra.mxu0 0
        %614 = vmatprep.subr.bf16.mxu0 0
        %615 = vmatpush1.bf16.msra.mxu0 0
        %616 = vmatprep.subr.bf16.mxu0 0
        %617 = vmatpush1.bf16.msra.mxu0 0
        %618 = vmatprep.subr.bf16.mxu0 0
        %619 = vmatpush1.bf16.msra.mxu0 0
        %620 = vmatprep.subr.bf16.mxu0 0
        %621 = vmatpush1.bf16.msra.mxu0 0
        %622 = vmatprep.subr.bf16.mxu0 0
        %623 = vmatpush1.bf16.msra.mxu0 0
        %624 = vmatprep.subr.bf16.mxu0 0
        %625 = vmatpush1.bf16.msra.mxu0 0
        %626 = vmatprep.subr.bf16.mxu0 0
        %627 = vmatpush1.bf16.msra.mxu0 %v609
        %628 = vmatprep.subr.bf16.mxu0 0
        %629 = vmatpush2.bf16.msra.mxu0 0
        %630 = vmatprep.subr.bf16.mxu0 0
        %631 = vmatpush2.bf16.msra.mxu0 0
        %632 = vmatprep.subr.bf16.mxu0 0
        %633 = vmatpush2.bf16.msra.mxu0 0
        %634 = vmatprep.subr.bf16.mxu0 0
        %635 = vmatpush2.bf16.msra.mxu0 0
        %636 = vmatprep.subr.bf16.mxu0 0
        %637 = vmatpush2.bf16.msra.mxu0 0
        %638 = vmatprep.subr.bf16.mxu0 0
        %639 = vmatpush2.bf16.msra.mxu0 0
        %640 = vmatprep.subr.bf16.mxu0 0
        %641 = vmatpush2.bf16.msra.mxu0 0
        %642 = vmatprep.subr.bf16.mxu0 0
        %643 = vmatpush2.bf16.msra.mxu0 0
        %644 = vmatprep.mubr.bf16.mxu0 0
        %645 = vmatmul.mubr.bf16.gmra.mxu0 %v458
        %v646 = vpop.f32.mrf.mxu0
        %v647 = vadd.f32 %v444, %v646
        %v648 = vpop.f32.mrf.mxu0
        %v649 = vpop.f32.mrf.mxu0
        %v650 = vadd.f32 %v449, %v649
        %v651 = vpop.f32.mrf.mxu0
        %652 = vdwg.mxu0
        %v653 = vmul.f32 %v610, %v647
        %v654 = vmul.f32 %v611, %v650
        %655 = vst [vmem:[%s383 + $0x10] sm:$0xff] %v653
        %656 = vst [vmem:[%s383 + $0x50] sm:$0xff] %v654
        %v657 = vld [vmem:[%s360 + $0x38] sm:$0xff]
        %v658 = vld [vmem:[%s360 + $0xb8] sm:$0xff]
        %659 = vadd.xlane.f32.xlu0 %v657
        %v660 = vpop.xlane.xlu0 %659
        %661 = vadd.xlane.f32.xlu0 %v658
        %v662 = vpop.xlane.xlu0 %661
        %v663 = vmul.f32 %v660, %v403
        %v664 = vmul.f32 %v662, %v403
        %v665 = vsub.f32 %v657, %v663
        %v666 = vsub.f32 %v658, %v664
        %v667 = vmul.f32 %v665, %v665
        %v668 = vmul.f32 %v666, %v666
        %669 = vadd.xlane.f32.xlu0 %v667
        %v670 = vpop.xlane.xlu0 %669
        %671 = vadd.xlane.f32.xlu0 %v668
        %v672 = vpop.xlane.xlu0 %671
        %v673 = vmul.f32 %v670, %v403
        %v674 = vmul.f32 %v672, %v403
        %v675 = vadd.f32 %v673, 1e-05
        %v676 = vadd.f32 %v674, 1e-05
        %v677 = vrsqrt.pop %v675
        %v678 = vrsqrt.pop %v676
        %v679 = vmul.f32 %v665, %v677
        %v680 = vmul.f32 %v666, %v678
        %v681 = vmul.f32 %v679, %v426
        %v682 = vmul.f32 %v680, %v426
        %v683 = vadd.f32 %v681, %v434
        %v684 = vadd.f32 %v682, %v434
        %v685 = vpack.c.bf16 %v684, %v683
        %v686 = vld [vmem:[%s360 + $0x30] sm:$0xff]
        %v687 = vld [vmem:[%s360 + $0xb0] sm:$0xff]
        %688 = vmatprep.subr.bf16.mxu0 0
        %689 = vmatpush1.bf16.msra.mxu0 0
        %690 = vmatprep.subr.bf16.mxu0 0
        %691 = vmatpush1.bf16.msra.mxu0 0
        %692 = vmatprep.subr.bf16.mxu0 0
        %693 = vmatpush1.bf16.msra.mxu0 0
        %694 = vmatprep.subr.bf16.mxu0 0
        %695 = vmatpush1.bf16.msra.mxu0 0
        %696 = vmatprep.subr.bf16.mxu0 0
        %697 = vmatpush1.bf16.msra.mxu0 0
        %698 = vmatprep.subr.bf16.mxu0 0
        %699 = vmatpush1.bf16.msra.mxu0 0
        %700 = vmatprep.subr.bf16.mxu0 0
        %701 = vmatpush1.bf16.msra.mxu0 0
        %702 = vmatprep.subr.bf16.mxu0 0
        %703 = vmatpush1.bf16.msra.mxu0 %v685
        %704 = vmatprep.subr.bf16.mxu0 0
        %705 = vmatpush2.bf16.msra.mxu0 0
        %706 = vmatprep.subr.bf16.mxu0 0
        %707 = vmatpush2.bf16.msra.mxu0 0
        %708 = vmatprep.subr.bf16.mxu0 0
        %709 = vmatpush2.bf16.msra.mxu0 0
        %710 = vmatprep.subr.bf16.mxu0 0
        %711 = vmatpush2.bf16.msra.mxu0 0
        %712 = vmatprep.subr.bf16.mxu0 0
        %713 = vmatpush2.bf16.msra.mxu0 0
        %714 = vmatprep.subr.bf16.mxu0 0
        %715 = vmatpush2.bf16.msra.mxu0 0
        %716 = vmatprep.subr.bf16.mxu0 0
        %717 = vmatpush2.bf16.msra.mxu0 0
        %718 = vmatprep.subr.bf16.mxu0 0
        %719 = vmatpush2.bf16.msra.mxu0 0
        %720 = vmatprep.mubr.bf16.mxu0 0
        %721 = vmatmul.mubr.bf16.gmra.mxu0 %v458
        %v722 = vpop.f32.mrf.mxu0
        %v723 = vadd.f32 %v444, %v722
        %v724 = vpop.f32.mrf.mxu0
        %v725 = vpop.f32.mrf.mxu0
        %v726 = vadd.f32 %v449, %v725
        %v727 = vpop.f32.mrf.mxu0
        %728 = vdwg.mxu0
        %v729 = vmul.f32 %v686, %v723
        %v730 = vmul.f32 %v687, %v726
        %731 = vst [vmem:[%s383 + $0x18] sm:$0xff] %v729
        %732 = vst [vmem:[%s383 + $0x58] sm:$0xff] %v730
        %v733 = vld [vmem:[%s360 + $0x48] sm:$0xff]
        %v734 = vld [vmem:[%s360 + $0xc8] sm:$0xff]
        %735 = vadd.xlane.f32.xlu0 %v733
        %v736 = vpop.xlane.xlu0 %735
        %737 = vadd.xlane.f32.xlu0 %v734
        %v738 = vpop.xlane.xlu0 %737
        %v739 = vmul.f32 %v736, %v403
        %v740 = vmul.f32 %v738, %v403
        %v741 = vsub.f32 %v733, %v739
        %v742 = vsub.f32 %v734, %v740
        %v743 = vmul.f32 %v741, %v741
        %v744 = vmul.f32 %v742, %v742
        %745 = vadd.xlane.f32.xlu0 %v743
        %v746 = vpop.xlane.xlu0 %745
        %747 = vadd.xlane.f32.xlu0 %v744
        %v748 = vpop.xlane.xlu0 %747
        %v749 = vmul.f32 %v746, %v403
        %v750 = vmul.f32 %v748, %v403
        %v751 = vadd.f32 %v749, 1e-05
        %v752 = vadd.f32 %v750, 1e-05
        %v753 = vrsqrt.pop %v751
        %v754 = vrsqrt.pop %v752
        %v755 = vmul.f32 %v741, %v753
        %v756 = vmul.f32 %v742, %v754
        %v757 = vmul.f32 %v755, %v426
        %v758 = vmul.f32 %v756, %v426
        %v759 = vadd.f32 %v757, %v434
        %v760 = vadd.f32 %v758, %v434
        %v761 = vpack.c.bf16 %v760, %v759
        %v762 = vld [vmem:[%s360 + $0x40] sm:$0xff]
        %v763 = vld [vmem:[%s360 + $0xc0] sm:$0xff]
        %764 = vmatprep.subr.bf16.mxu0 0
        %765 = vmatpush1.bf16.msra.mxu0 0
        %766 = vmatprep.subr.bf16.mxu0 0
        %767 = vmatpush1.bf16.msra.mxu0 0
        %768 = vmatprep.subr.bf16.mxu0 0
        %769 = vmatpush1.bf16.msra.mxu0 0
        %770 = vmatprep.subr.bf16.mxu0 0
        %771 = vmatpush1.bf16.msra.mxu0 0
        %772 = vmatprep.subr.bf16.mxu0 0
        %773 = vmatpush1.bf16.msra.mxu0 0
        %774 = vmatprep.subr.bf16.mxu0 0
        %775 = vmatpush1.bf16.msra.mxu0 0
        %776 = vmatprep.subr.bf16.mxu0 0
        %777 = vmatpush1.bf16.msra.mxu0 0
        %778 = vmatprep.subr.bf16.mxu0 0
        %779 = vmatpush1.bf16.msra.mxu0 %v761
        %780 = vmatprep.subr.bf16.mxu0 0
        %781 = vmatpush2.bf16.msra.mxu0 0
        %782 = vmatprep.subr.bf16.mxu0 0
        %783 = vmatpush2.bf16.msra.mxu0 0
        %784 = vmatprep.subr.bf16.mxu0 0
        %785 = vmatpush2.bf16.msra.mxu0 0
        %786 = vmatprep.subr.bf16.mxu0 0
        %787 = vmatpush2.bf16.msra.mxu0 0
        %788 = vmatprep.subr.bf16.mxu0 0
        %789 = vmatpush2.bf16.msra.mxu0 0
        %790 = vmatprep.subr.bf16.mxu0 0
        %791 = vmatpush2.bf16.msra.mxu0 0
        %792 = vmatprep.subr.bf16.mxu0 0
        %793 = vmatpush2.bf16.msra.mxu0 0
        %794 = vmatprep.subr.bf16.mxu0 0
        %795 = vmatpush2.bf16.msra.mxu0 0
        %796 = vmatprep.mubr.bf16.mxu0 0
        %797 = vmatmul.mubr.bf16.gmra.mxu0 %v458
        %v798 = vpop.f32.mrf.mxu0
        %v799 = vadd.f32 %v444, %v798
        %v800 = vpop.f32.mrf.mxu0
        %v801 = vpop.f32.mrf.mxu0
        %v802 = vadd.f32 %v449, %v801
        %v803 = vpop.f32.mrf.mxu0
        %804 = vdwg.mxu0
        %v805 = vmul.f32 %v762, %v799
        %v806 = vmul.f32 %v763, %v802
        %807 = vst [vmem:[%s383 + $0x20] sm:$0xff] %v805
        %808 = vst [vmem:[%s383 + $0x60] sm:$0xff] %v806
        %v809 = vld [vmem:[%s360 + $0x58] sm:$0xff]
        %v810 = vld [vmem:[%s360 + $0xd8] sm:$0xff]
        %811 = vadd.xlane.f32.xlu0 %v809
        %v812 = vpop.xlane.xlu0 %811
        %813 = vadd.xlane.f32.xlu0 %v810
        %v814 = vpop.xlane.xlu0 %813
        %v815 = vmul.f32 %v812, %v403
        %v816 = vmul.f32 %v814, %v403
        %v817 = vsub.f32 %v809, %v815
        %v818 = vsub.f32 %v810, %v816
        %v819 = vmul.f32 %v817, %v817
        %v820 = vmul.f32 %v818, %v818
        %821 = vadd.xlane.f32.xlu0 %v819
        %v822 = vpop.xlane.xlu0 %821
        %823 = vadd.xlane.f32.xlu0 %v820
        %v824 = vpop.xlane.xlu0 %823
        %v825 = vmul.f32 %v822, %v403
        %v826 = vmul.f32 %v824, %v403
        %v827 = vadd.f32 %v825, 1e-05
        %v828 = vadd.f32 %v826, 1e-05
        %v829 = vrsqrt.pop %v827
        %v830 = vrsqrt.pop %v828
        %v831 = vmul.f32 %v817, %v829
        %v832 = vmul.f32 %v818, %v830
        %v833 = vmul.f32 %v831, %v426
        %v834 = vmul.f32 %v832, %v426
        %v835 = vadd.f32 %v833, %v434
        %v836 = vadd.f32 %v834, %v434
        %v837 = vpack.c.bf16 %v836, %v835
        %v838 = vld [vmem:[%s360 + $0x50] sm:$0xff]
        %v839 = vld [vmem:[%s360 + $0xd0] sm:$0xff]
        %840 = vmatprep.subr.bf16.mxu0 0
        %841 = vmatpush1.bf16.msra.mxu0 0
        %842 = vmatprep.subr.bf16.mxu0 0
        %843 = vmatpush1.bf16.msra.mxu0 0
        %844 = vmatprep.subr.bf16.mxu0 0
        %845 = vmatpush1.bf16.msra.mxu0 0
        %846 = vmatprep.subr.bf16.mxu0 0
        %847 = vmatpush1.bf16.msra.mxu0 0
        %848 = vmatprep.subr.bf16.mxu0 0
        %849 = vmatpush1.bf16.msra.mxu0 0
        %850 = vmatprep.subr.bf16.mxu0 0
        %851 = vmatpush1.bf16.msra.mxu0 0
        %852 = vmatprep.subr.bf16.mxu0 0
        %853 = vmatpush1.bf16.msra.mxu0 0
        %854 = vmatprep.subr.bf16.mxu0 0
        %855 = vmatpush1.bf16.msra.mxu0 %v837
        %856 = vmatprep.subr.bf16.mxu0 0
        %857 = vmatpush2.bf16.msra.mxu0 0
        %858 = vmatprep.subr.bf16.mxu0 0
        %859 = vmatpush2.bf16.msra.mxu0 0
        %860 = vmatprep.subr.bf16.mxu0 0
        %861 = vmatpush2.bf16.msra.mxu0 0
        %862 = vmatprep.subr.bf16.mxu0 0
        %863 = vmatpush2.bf16.msra.mxu0 0
        %864 = vmatprep.subr.bf16.mxu0 0
        %865 = vmatpush2.bf16.msra.mxu0 0
        %866 = vmatprep.subr.bf16.mxu0 0
        %867 = vmatpush2.bf16.msra.mxu0 0
        %868 = vmatprep.subr.bf16.mxu0 0
        %869 = vmatpush2.bf16.msra.mxu0 0
        %870 = vmatprep.subr.bf16.mxu0 0
        %871 = vmatpush2.bf16.msra.mxu0 0
        %872 = vmatprep.mubr.bf16.mxu0 0
        %873 = vmatmul.mubr.bf16.gmra.mxu0 %v458
        %v874 = vpop.f32.mrf.mxu0
        %v875 = vadd.f32 %v444, %v874
        %v876 = vpop.f32.mrf.mxu0
        %v877 = vpop.f32.mrf.mxu0
        %v878 = vadd.f32 %v449, %v877
        %v879 = vpop.f32.mrf.mxu0
        %880 = vdwg.mxu0
        %v881 = vmul.f32 %v838, %v875
        %v882 = vmul.f32 %v839, %v878
        %883 = vst [vmem:[%s383 + $0x28] sm:$0xff] %v881
        %884 = vst [vmem:[%s383 + $0x68] sm:$0xff] %v882
        %v885 = vld [vmem:[%s360 + $0x68] sm:$0xff]
        %v886 = vld [vmem:[%s360 + $0xe8] sm:$0xff]
        %887 = vadd.xlane.f32.xlu0 %v885
        %v888 = vpop.xlane.xlu0 %887
        %889 = vadd.xlane.f32.xlu0 %v886
        %v890 = vpop.xlane.xlu0 %889
        %v891 = vmul.f32 %v888, %v403
        %v892 = vmul.f32 %v890, %v403
        %v893 = vsub.f32 %v885, %v891
        %v894 = vsub.f32 %v886, %v892
        %v895 = vmul.f32 %v893, %v893
        %v896 = vmul.f32 %v894, %v894
        %897 = vadd.xlane.f32.xlu0 %v895
        %v898 = vpop.xlane.xlu0 %897
        %899 = vadd.xlane.f32.xlu0 %v896
        %v900 = vpop.xlane.xlu0 %899
        %v901 = vmul.f32 %v898, %v403
        %v902 = vmul.f32 %v900, %v403
        %v903 = vadd.f32 %v901, 1e-05
        %v904 = vadd.f32 %v902, 1e-05
        %v905 = vrsqrt.pop %v903
        %v906 = vrsqrt.pop %v904
        %v907 = vmul.f32 %v893, %v905
        %v908 = vmul.f32 %v894, %v906
        %v909 = vmul.f32 %v907, %v426
        %v910 = vmul.f32 %v908, %v426
        %v911 = vadd.f32 %v909, %v434
        %v912 = vadd.f32 %v910, %v434
        %v913 = vpack.c.bf16 %v912, %v911
        %v914 = vld [vmem:[%s360 + $0x60] sm:$0xff]
        %v915 = vld [vmem:[%s360 + $0xe0] sm:$0xff]
        %916 = vmatprep.subr.bf16.mxu0 0
        %917 = vmatpush1.bf16.msra.mxu0 0
        %918 = vmatprep.subr.bf16.mxu0 0
        %919 = vmatpush1.bf16.msra.mxu0 0
        %920 = vmatprep.subr.bf16.mxu0 0
        %921 = vmatpush1.bf16.msra.mxu0 0
        %922 = vmatprep.subr.bf16.mxu0 0
        %923 = vmatpush1.bf16.msra.mxu0 0
        %924 = vmatprep.subr.bf16.mxu0 0
        %925 = vmatpush1.bf16.msra.mxu0 0
        %926 = vmatprep.subr.bf16.mxu0 0
        %927 = vmatpush1.bf16.msra.mxu0 0
        %928 = vmatprep.subr.bf16.mxu0 0
        %929 = vmatpush1.bf16.msra.mxu0 0
        %930 = vmatprep.subr.bf16.mxu0 0
        %931 = vmatpush1.bf16.msra.mxu0 %v913
        %932 = vmatprep.subr.bf16.mxu0 0
        %933 = vmatpush2.bf16.msra.mxu0 0
        %934 = vmatprep.subr.bf16.mxu0 0
        %935 = vmatpush2.bf16.msra.mxu0 0
        %936 = vmatprep.subr.bf16.mxu0 0
        %937 = vmatpush2.bf16.msra.mxu0 0
        %938 = vmatprep.subr.bf16.mxu0 0
        %939 = vmatpush2.bf16.msra.mxu0 0
        %940 = vmatprep.subr.bf16.mxu0 0
        %941 = vmatpush2.bf16.msra.mxu0 0
        %942 = vmatprep.subr.bf16.mxu0 0
        %943 = vmatpush2.bf16.msra.mxu0 0
        %944 = vmatprep.subr.bf16.mxu0 0
        %945 = vmatpush2.bf16.msra.mxu0 0
        %946 = vmatprep.subr.bf16.mxu0 0
        %947 = vmatpush2.bf16.msra.mxu0 0
        %948 = vmatprep.mubr.bf16.mxu0 0
        %949 = vmatmul.mubr.bf16.gmra.mxu0 %v458
        %v950 = vpop.f32.mrf.mxu0
        %v951 = vadd.f32 %v444, %v950
        %v952 = vpop.f32.mrf.mxu0
        %v953 = vpop.f32.mrf.mxu0
        %v954 = vadd.f32 %v449, %v953
        %v955 = vpop.f32.mrf.mxu0
        %956 = vdwg.mxu0
        %v957 = vmul.f32 %v914, %v951
        %v958 = vmul.f32 %v915, %v954
        %959 = vst [vmem:[%s383 + $0x30] sm:$0xff] %v957
        %960 = vst [vmem:[%s383 + $0x70] sm:$0xff] %v958
        %v961 = vld [vmem:[%s360 + $0x78] sm:$0xff]
        %v962 = vld [vmem:[%s360 + $0xf8] sm:$0xff]
        %963 = vadd.xlane.f32.xlu0 %v961
        %v964 = vpop.xlane.xlu0 %963
        %965 = vadd.xlane.f32.xlu0 %v962
        %v966 = vpop.xlane.xlu0 %965
        %v967 = vmul.f32 %v964, %v403
        %v968 = vmul.f32 %v966, %v403
        %v969 = vsub.f32 %v961, %v967
        %v970 = vsub.f32 %v962, %v968
        %v971 = vmul.f32 %v969, %v969
        %v972 = vmul.f32 %v970, %v970
        %973 = vadd.xlane.f32.xlu0 %v971
        %v974 = vpop.xlane.xlu0 %973
        %975 = vadd.xlane.f32.xlu0 %v972
        %v976 = vpop.xlane.xlu0 %975
        %v977 = vmul.f32 %v974, %v403
        %v978 = vmul.f32 %v976, %v403
        %v979 = vadd.f32 %v977, 1e-05
        %v980 = vadd.f32 %v978, 1e-05
        %v981 = vrsqrt.pop %v979
        %v982 = vrsqrt.pop %v980
        %v983 = vmul.f32 %v969, %v981
        %v984 = vmul.f32 %v970, %v982
        %v985 = vmul.f32 %v983, %v426
        %v986 = vmul.f32 %v984, %v426
        %v987 = vadd.f32 %v985, %v434
        %v988 = vadd.f32 %v986, %v434
        %v989 = vpack.c.bf16 %v988, %v987
        %v990 = vld [vmem:[%s360 + $0x70] sm:$0xff]
        %v991 = vld [vmem:[%s360 + $0xf0] sm:$0xff]
        %992 = vmatprep.subr.bf16.mxu0 0
        %993 = vmatpush1.bf16.msra.mxu0 0
        %994 = vmatprep.subr.bf16.mxu0 0
        %995 = vmatpush1.bf16.msra.mxu0 0
        %996 = vmatprep.subr.bf16.mxu0 0
        %997 = vmatpush1.bf16.msra.mxu0 0
        %998 = vmatprep.subr.bf16.mxu0 0
        %999 = vmatpush1.bf16.msra.mxu0 0
        %1000 = vmatprep.subr.bf16.mxu0 0
        %1001 = vmatpush1.bf16.msra.mxu0 0
        %1002 = vmatprep.subr.bf16.mxu0 0
        %1003 = vmatpush1.bf16.msra.mxu0 0
        %1004 = vmatprep.subr.bf16.mxu0 0
        %1005 = vmatpush1.bf16.msra.mxu0 0
        %1006 = vmatprep.subr.bf16.mxu0 0
        %1007 = vmatpush1.bf16.msra.mxu0 %v989
        %1008 = vmatprep.subr.bf16.mxu0 0
        %1009 = vmatpush2.bf16.msra.mxu0 0
        %1010 = vmatprep.subr.bf16.mxu0 0
        %1011 = vmatpush2.bf16.msra.mxu0 0
        %1012 = vmatprep.subr.bf16.mxu0 0
        %1013 = vmatpush2.bf16.msra.mxu0 0
        %1014 = vmatprep.subr.bf16.mxu0 0
        %1015 = vmatpush2.bf16.msra.mxu0 0
        %1016 = vmatprep.subr.bf16.mxu0 0
        %1017 = vmatpush2.bf16.msra.mxu0 0
        %1018 = vmatprep.subr.bf16.mxu0 0
        %1019 = vmatpush2.bf16.msra.mxu0 0
        %1020 = vmatprep.subr.bf16.mxu0 0
        %1021 = vmatpush2.bf16.msra.mxu0 0
        %1022 = vmatprep.subr.bf16.mxu0 0
        %1023 = vmatpush2.bf16.msra.mxu0 0
        %1024 = vmatprep.mubr.bf16.mxu0 0
        %1025 = vmatmul.mubr.bf16.gmra.mxu0 %v458
        %v1026 = vpop.f32.mrf.mxu0
        %v1027 = vadd.f32 %v444, %v1026
        %v1028 = vpop.f32.mrf.mxu0
        %v1029 = vpop.f32.mrf.mxu0
        %v1030 = vadd.f32 %v449, %v1029
        %v1031 = vpop.f32.mrf.mxu0
        %1032 = vdwg.mxu0
        %v1033 = vmul.f32 %v990, %v1027
        %v1034 = vmul.f32 %v991, %v1030
        %1035 = vst [vmem:[%s383 + $0x38] sm:$0xff] %v1033
        %1036 = vst [vmem:[%s383 + $0x78] sm:$0xff] %v1034
        %s1037 = scalar_lea.vmem %s360, 256 [#allocation2]
        %v1038 = vld [vmem:[%s1037 + $0x8] sm:$0xff]
        %v1039 = vld [vmem:[%s1037 + $0x88] sm:$0xff]
        %1040 = vadd.xlane.f32.xlu0 %v1038
        %v1041 = vpop.xlane.xlu0 %1040
        %1042 = vadd.xlane.f32.xlu0 %v1039
        %v1043 = vpop.xlane.xlu0 %1042
        %v1044 = vmul.f32 %v1041, %v403
        %v1045 = vmul.f32 %v1043, %v403
        %v1046 = vsub.f32 %v1038, %v1044
        %v1047 = vsub.f32 %v1039, %v1045
        %v1048 = vmul.f32 %v1046, %v1046
        %v1049 = vmul.f32 %v1047, %v1047
        %1050 = vadd.xlane.f32.xlu0 %v1048
        %v1051 = vpop.xlane.xlu0 %1050
        %1052 = vadd.xlane.f32.xlu0 %v1049
        %v1053 = vpop.xlane.xlu0 %1052
        %v1054 = vmul.f32 %v1051, %v403
        %v1055 = vmul.f32 %v1053, %v403
        %v1056 = vadd.f32 %v1054, 1e-05
        %v1057 = vadd.f32 %v1055, 1e-05
        %v1058 = vrsqrt.pop %v1056
        %v1059 = vrsqrt.pop %v1057
        %v1060 = vmul.f32 %v1046, %v1058
        %v1061 = vmul.f32 %v1047, %v1059
        %v1062 = vmul.f32 %v1060, %v426
        %v1063 = vmul.f32 %v1061, %v426
        %v1064 = vadd.f32 %v1062, %v434
        %v1065 = vadd.f32 %v1063, %v434
        %v1066 = vpack.c.bf16 %v1065, %v1064
        %v1067 = vld [vmem:[%s1037] sm:$0xff]
        %v1068 = vld [vmem:[%s1037 + $0x80] sm:$0xff]
        %1069 = vmatprep.subr.bf16.mxu0 0
        %1070 = vmatpush1.bf16.msra.mxu0 0
        %1071 = vmatprep.subr.bf16.mxu0 0
        %1072 = vmatpush1.bf16.msra.mxu0 0
        %1073 = vmatprep.subr.bf16.mxu0 0
        %1074 = vmatpush1.bf16.msra.mxu0 0
        %1075 = vmatprep.subr.bf16.mxu0 0
        %1076 = vmatpush1.bf16.msra.mxu0 0
        %1077 = vmatprep.subr.bf16.mxu0 0
        %1078 = vmatpush1.bf16.msra.mxu0 0
        %1079 = vmatprep.subr.bf16.mxu0 0
        %1080 = vmatpush1.bf16.msra.mxu0 0
        %1081 = vmatprep.subr.bf16.mxu0 0
        %1082 = vmatpush1.bf16.msra.mxu0 0
        %1083 = vmatprep.subr.bf16.mxu0 0
        %1084 = vmatpush1.bf16.msra.mxu0 %v1066
        %1085 = vmatprep.subr.bf16.mxu0 0
        %1086 = vmatpush2.bf16.msra.mxu0 0
        %1087 = vmatprep.subr.bf16.mxu0 0
        %1088 = vmatpush2.bf16.msra.mxu0 0
        %1089 = vmatprep.subr.bf16.mxu0 0
        %1090 = vmatpush2.bf16.msra.mxu0 0
        %1091 = vmatprep.subr.bf16.mxu0 0
        %1092 = vmatpush2.bf16.msra.mxu0 0
        %1093 = vmatprep.subr.bf16.mxu0 0
        %1094 = vmatpush2.bf16.msra.mxu0 0
        %1095 = vmatprep.subr.bf16.mxu0 0
        %1096 = vmatpush2.bf16.msra.mxu0 0
        %1097 = vmatprep.subr.bf16.mxu0 0
        %1098 = vmatpush2.bf16.msra.mxu0 0
        %1099 = vmatprep.subr.bf16.mxu0 0
        %1100 = vmatpush2.bf16.msra.mxu0 0
        %1101 = vmatprep.mubr.bf16.mxu0 0
        %1102 = vmatmul.mubr.bf16.gmra.mxu0 %v458
        %v1103 = vpop.f32.mrf.mxu0
        %v1104 = vadd.f32 %v444, %v1103
        %v1105 = vpop.f32.mrf.mxu0
        %v1106 = vpop.f32.mrf.mxu0
        %v1107 = vadd.f32 %v449, %v1106
        %v1108 = vpop.f32.mrf.mxu0
        %1109 = vdwg.mxu0
        %v1110 = vmul.f32 %v1067, %v1104
        %v1111 = vmul.f32 %v1068, %v1107
        %s1112 = scalar_lea.vmem %s383, 128 [#allocation3]
        %1113 = vst [vmem:[%s1112] sm:$0xff] %v1110
        %1114 = vst [vmem:[%s1112 + $0x40] sm:$0xff] %v1111
        %v1115 = vld [vmem:[%s1037 + $0x18] sm:$0xff]
        %v1116 = vld [vmem:[%s1037 + $0x98] sm:$0xff]
        %1117 = vadd.xlane.f32.xlu0 %v1115
        %v1118 = vpop.xlane.xlu0 %1117
        %1119 = vadd.xlane.f32.xlu0 %v1116
        %v1120 = vpop.xlane.xlu0 %1119
        %v1121 = vmul.f32 %v1118, %v403
        %v1122 = vmul.f32 %v1120, %v403
        %v1123 = vsub.f32 %v1115, %v1121
        %v1124 = vsub.f32 %v1116, %v1122
        %v1125 = vmul.f32 %v1123, %v1123
        %v1126 = vmul.f32 %v1124, %v1124
        %1127 = vadd.xlane.f32.xlu0 %v1125
        %v1128 = vpop.xlane.xlu0 %1127
        %1129 = vadd.xlane.f32.xlu0 %v1126
        %v1130 = vpop.xlane.xlu0 %1129
        %v1131 = vmul.f32 %v1128, %v403
        %v1132 = vmul.f32 %v1130, %v403
        %v1133 = vadd.f32 %v1131, 1e-05
        %v1134 = vadd.f32 %v1132, 1e-05
        %v1135 = vrsqrt.pop %v1133
        %v1136 = vrsqrt.pop %v1134
        %v1137 = vmul.f32 %v1123, %v1135
        %v1138 = vmul.f32 %v1124, %v1136
        %v1139 = vmul.f32 %v1137, %v426
        %v1140 = vmul.f32 %v1138, %v426
        %v1141 = vadd.f32 %v1139, %v434
        %v1142 = vadd.f32 %v1140, %v434
        %v1143 = vpack.c.bf16 %v1142, %v1141
        %v1144 = vld [vmem:[%s1037 + $0x10] sm:$0xff]
        %v1145 = vld [vmem:[%s1037 + $0x90] sm:$0xff]
        %1146 = vmatprep.subr.bf16.mxu0 0
        %1147 = vmatpush1.bf16.msra.mxu0 0
        %1148 = vmatprep.subr.bf16.mxu0 0
        %1149 = vmatpush1.bf16.msra.mxu0 0
        %1150 = vmatprep.subr.bf16.mxu0 0
        %1151 = vmatpush1.bf16.msra.mxu0 0
        %1152 = vmatprep.subr.bf16.mxu0 0
        %1153 = vmatpush1.bf16.msra.mxu0 0
        %1154 = vmatprep.subr.bf16.mxu0 0
        %1155 = vmatpush1.bf16.msra.mxu0 0
        %1156 = vmatprep.subr.bf16.mxu0 0
        %1157 = vmatpush1.bf16.msra.mxu0 0
        %1158 = vmatprep.subr.bf16.mxu0 0
        %1159 = vmatpush1.bf16.msra.mxu0 0
        %1160 = vmatprep.subr.bf16.mxu0 0
        %1161 = vmatpush1.bf16.msra.mxu0 %v1143
        %1162 = vmatprep.subr.bf16.mxu0 0
        %1163 = vmatpush2.bf16.msra.mxu0 0
        %1164 = vmatprep.subr.bf16.mxu0 0
        %1165 = vmatpush2.bf16.msra.mxu0 0
        %1166 = vmatprep.subr.bf16.mxu0 0
        %1167 = vmatpush2.bf16.msra.mxu0 0
        %1168 = vmatprep.subr.bf16.mxu0 0
        %1169 = vmatpush2.bf16.msra.mxu0 0
        %1170 = vmatprep.subr.bf16.mxu0 0
        %1171 = vmatpush2.bf16.msra.mxu0 0
        %1172 = vmatprep.subr.bf16.mxu0 0
        %1173 = vmatpush2.bf16.msra.mxu0 0
        %1174 = vmatprep.subr.bf16.mxu0 0
        %1175 = vmatpush2.bf16.msra.mxu0 0
        %1176 = vmatprep.subr.bf16.mxu0 0
        %1177 = vmatpush2.bf16.msra.mxu0 0
        %1178 = vmatprep.mubr.bf16.mxu0 0
        %1179 = vmatmul.mubr.bf16.gmra.mxu0 %v458
        %v1180 = vpop.f32.mrf.mxu0
        %v1181 = vadd.f32 %v444, %v1180
        %v1182 = vpop.f32.mrf.mxu0
        %v1183 = vpop.f32.mrf.mxu0
        %v1184 = vadd.f32 %v449, %v1183
        %v1185 = vpop.f32.mrf.mxu0
        %1186 = vdwg.mxu0
        %v1187 = vmul.f32 %v1144, %v1181
        %v1188 = vmul.f32 %v1145, %v1184
        %1189 = vst [vmem:[%s1112 + $0x8] sm:$0xff] %v1187
        %1190 = vst [vmem:[%s1112 + $0x48] sm:$0xff] %v1188
        %v1191 = vld [vmem:[%s1037 + $0x28] sm:$0xff]
        %v1192 = vld [vmem:[%s1037 + $0xa8] sm:$0xff]
        %1193 = vadd.xlane.f32.xlu0 %v1191
        %v1194 = vpop.xlane.xlu0 %1193
        %1195 = vadd.xlane.f32.xlu0 %v1192
        %v1196 = vpop.xlane.xlu0 %1195
        %v1197 = vmul.f32 %v1194, %v403
        %v1198 = vmul.f32 %v1196, %v403
        %v1199 = vsub.f32 %v1191, %v1197
        %v1200 = vsub.f32 %v1192, %v1198
        %v1201 = vmul.f32 %v1199, %v1199
        %v1202 = vmul.f32 %v1200, %v1200
        %1203 = vadd.xlane.f32.xlu0 %v1201
        %v1204 = vpop.xlane.xlu0 %1203
        %1205 = vadd.xlane.f32.xlu0 %v1202
        %v1206 = vpop.xlane.xlu0 %1205
        %v1207 = vmul.f32 %v1204, %v403
        %v1208 = vmul.f32 %v1206, %v403
        %v1209 = vadd.f32 %v1207, 1e-05
        %v1210 = vadd.f32 %v1208, 1e-05
        %v1211 = vrsqrt.pop %v1209
        %v1212 = vrsqrt.pop %v1210
        %v1213 = vmul.f32 %v1199, %v1211
        %v1214 = vmul.f32 %v1200, %v1212
        %v1215 = vmul.f32 %v1213, %v426
        %v1216 = vmul.f32 %v1214, %v426
        %v1217 = vadd.f32 %v1215, %v434
        %v1218 = vadd.f32 %v1216, %v434
        %v1219 = vpack.c.bf16 %v1218, %v1217
        %v1220 = vld [vmem:[%s1037 + $0x20] sm:$0xff]
        %v1221 = vld [vmem:[%s1037 + $0xa0] sm:$0xff]
        %1222 = vmatprep.subr.bf16.mxu0 0
        %1223 = vmatpush1.bf16.msra.mxu0 0
        %1224 = vmatprep.subr.bf16.mxu0 0
        %1225 = vmatpush1.bf16.msra.mxu0 0
        %1226 = vmatprep.subr.bf16.mxu0 0
        %1227 = vmatpush1.bf16.msra.mxu0 0
        %1228 = vmatprep.subr.bf16.mxu0 0
        %1229 = vmatpush1.bf16.msra.mxu0 0
        %1230 = vmatprep.subr.bf16.mxu0 0
        %1231 = vmatpush1.bf16.msra.mxu0 0
        %1232 = vmatprep.subr.bf16.mxu0 0
        %1233 = vmatpush1.bf16.msra.mxu0 0
        %1234 = vmatprep.subr.bf16.mxu0 0
        %1235 = vmatpush1.bf16.msra.mxu0 0
        %1236 = vmatprep.subr.bf16.mxu0 0
        %1237 = vmatpush1.bf16.msra.mxu0 %v1219
        %1238 = vmatprep.subr.bf16.mxu0 0
        %1239 = vmatpush2.bf16.msra.mxu0 0
        %1240 = vmatprep.subr.bf16.mxu0 0
        %1241 = vmatpush2.bf16.msra.mxu0 0
        %1242 = vmatprep.subr.bf16.mxu0 0
        %1243 = vmatpush2.bf16.msra.mxu0 0
        %1244 = vmatprep.subr.bf16.mxu0 0
        %1245 = vmatpush2.bf16.msra.mxu0 0
        %1246 = vmatprep.subr.bf16.mxu0 0
        %1247 = vmatpush2.bf16.msra.mxu0 0
        %1248 = vmatprep.subr.bf16.mxu0 0
        %1249 = vmatpush2.bf16.msra.mxu0 0
        %1250 = vmatprep.subr.bf16.mxu0 0
        %1251 = vmatpush2.bf16.msra.mxu0 0
        %1252 = vmatprep.subr.bf16.mxu0 0
        %1253 = vmatpush2.bf16.msra.mxu0 0
        %1254 = vmatprep.mubr.bf16.mxu0 0
        %1255 = vmatmul.mubr.bf16.gmra.mxu0 %v458
        %v1256 = vpop.f32.mrf.mxu0
        %v1257 = vadd.f32 %v444, %v1256
        %v1258 = vpop.f32.mrf.mxu0
        %v1259 = vpop.f32.mrf.mxu0
        %v1260 = vadd.f32 %v449, %v1259
        %v1261 = vpop.f32.mrf.mxu0
        %1262 = vdwg.mxu0
        %v1263 = vmul.f32 %v1220, %v1257
        %v1264 = vmul.f32 %v1221, %v1260
        %1265 = vst [vmem:[%s1112 + $0x10] sm:$0xff] %v1263
        %1266 = vst [vmem:[%s1112 + $0x50] sm:$0xff] %v1264
        %v1267 = vld [vmem:[%s1037 + $0x38] sm:$0xff]
        %v1268 = vld [vmem:[%s1037 + $0xb8] sm:$0xff]
        %1269 = vadd.xlane.f32.xlu0 %v1267
        %v1270 = vpop.xlane.xlu0 %1269
        %1271 = vadd.xlane.f32.xlu0 %v1268
        %v1272 = vpop.xlane.xlu0 %1271
        %v1273 = vmul.f32 %v1270, %v403
        %v1274 = vmul.f32 %v1272, %v403
        %v1275 = vsub.f32 %v1267, %v1273
        %v1276 = vsub.f32 %v1268, %v1274
        %v1277 = vmul.f32 %v1275, %v1275
        %v1278 = vmul.f32 %v1276, %v1276
        %1279 = vadd.xlane.f32.xlu0 %v1277
        %v1280 = vpop.xlane.xlu0 %1279
        %1281 = vadd.xlane.f32.xlu0 %v1278
        %v1282 = vpop.xlane.xlu0 %1281
        %v1283 = vmul.f32 %v1280, %v403
        %v1284 = vmul.f32 %v1282, %v403
        %v1285 = vadd.f32 %v1283, 1e-05
        %v1286 = vadd.f32 %v1284, 1e-05
        %v1287 = vrsqrt.pop %v1285
        %v1288 = vrsqrt.pop %v1286
        %v1289 = vmul.f32 %v1275, %v1287
        %v1290 = vmul.f32 %v1276, %v1288
        %v1291 = vmul.f32 %v1289, %v426
        %v1292 = vmul.f32 %v1290, %v426
        %v1293 = vadd.f32 %v1291, %v434
        %v1294 = vadd.f32 %v1292, %v434
        %v1295 = vpack.c.bf16 %v1294, %v1293
        %v1296 = vld [vmem:[%s1037 + $0x30] sm:$0xff]
        %v1297 = vld [vmem:[%s1037 + $0xb0] sm:$0xff]
        %1298 = vmatprep.subr.bf16.mxu0 0
        %1299 = vmatpush1.bf16.msra.mxu0 0
        %1300 = vmatprep.subr.bf16.mxu0 0
        %1301 = vmatpush1.bf16.msra.mxu0 0
        %1302 = vmatprep.subr.bf16.mxu0 0
        %1303 = vmatpush1.bf16.msra.mxu0 0
        %1304 = vmatprep.subr.bf16.mxu0 0
        %1305 = vmatpush1.bf16.msra.mxu0 0
        %1306 = vmatprep.subr.bf16.mxu0 0
        %1307 = vmatpush1.bf16.msra.mxu0 0
        %1308 = vmatprep.subr.bf16.mxu0 0
        %1309 = vmatpush1.bf16.msra.mxu0 0
        %1310 = vmatprep.subr.bf16.mxu0 0
        %1311 = vmatpush1.bf16.msra.mxu0 0
        %1312 = vmatprep.subr.bf16.mxu0 0
        %1313 = vmatpush1.bf16.msra.mxu0 %v1295
        %1314 = vmatprep.subr.bf16.mxu0 0
        %1315 = vmatpush2.bf16.msra.mxu0 0
        %1316 = vmatprep.subr.bf16.mxu0 0
        %1317 = vmatpush2.bf16.msra.mxu0 0
        %1318 = vmatprep.subr.bf16.mxu0 0
        %1319 = vmatpush2.bf16.msra.mxu0 0
        %1320 = vmatprep.subr.bf16.mxu0 0
        %1321 = vmatpush2.bf16.msra.mxu0 0
        %1322 = vmatprep.subr.bf16.mxu0 0
        %1323 = vmatpush2.bf16.msra.mxu0 0
        %1324 = vmatprep.subr.bf16.mxu0 0
        %1325 = vmatpush2.bf16.msra.mxu0 0
        %1326 = vmatprep.subr.bf16.mxu0 0
        %1327 = vmatpush2.bf16.msra.mxu0 0
        %1328 = vmatprep.subr.bf16.mxu0 0
        %1329 = vmatpush2.bf16.msra.mxu0 0
        %1330 = vmatprep.mubr.bf16.mxu0 0
        %1331 = vmatmul.mubr.bf16.gmra.mxu0 %v458
        %v1332 = vpop.f32.mrf.mxu0
        %v1333 = vadd.f32 %v444, %v1332
        %v1334 = vpop.f32.mrf.mxu0
        %v1335 = vpop.f32.mrf.mxu0
        %v1336 = vadd.f32 %v449, %v1335
        %v1337 = vpop.f32.mrf.mxu0
        %1338 = vdwg.mxu0
        %v1339 = vmul.f32 %v1296, %v1333
        %v1340 = vmul.f32 %v1297, %v1336
        %1341 = vst [vmem:[%s1112 + $0x18] sm:$0xff] %v1339
        %1342 = vst [vmem:[%s1112 + $0x58] sm:$0xff] %v1340
        %v1343 = vld [vmem:[%s1037 + $0x48] sm:$0xff]
        %v1344 = vld [vmem:[%s1037 + $0xc8] sm:$0xff]
        %1345 = vadd.xlane.f32.xlu0 %v1343
        %v1346 = vpop.xlane.xlu0 %1345
        %1347 = vadd.xlane.f32.xlu0 %v1344
        %v1348 = vpop.xlane.xlu0 %1347
        %v1349 = vmul.f32 %v1346, %v403
        %v1350 = vmul.f32 %v1348, %v403
        %v1351 = vsub.f32 %v1343, %v1349
        %v1352 = vsub.f32 %v1344, %v1350
        %v1353 = vmul.f32 %v1351, %v1351
        %v1354 = vmul.f32 %v1352, %v1352
        %1355 = vadd.xlane.f32.xlu0 %v1353
        %v1356 = vpop.xlane.xlu0 %1355
        %1357 = vadd.xlane.f32.xlu0 %v1354
        %v1358 = vpop.xlane.xlu0 %1357
        %v1359 = vmul.f32 %v1356, %v403
        %v1360 = vmul.f32 %v1358, %v403
        %v1361 = vadd.f32 %v1359, 1e-05
        %v1362 = vadd.f32 %v1360, 1e-05
        %v1363 = vrsqrt.pop %v1361
        %v1364 = vrsqrt.pop %v1362
        %v1365 = vmul.f32 %v1351, %v1363
        %v1366 = vmul.f32 %v1352, %v1364
        %v1367 = vmul.f32 %v1365, %v426
        %v1368 = vmul.f32 %v1366, %v426
        %v1369 = vadd.f32 %v1367, %v434
        %v1370 = vadd.f32 %v1368, %v434
        %v1371 = vpack.c.bf16 %v1370, %v1369
        %v1372 = vld [vmem:[%s1037 + $0x40] sm:$0xff]
        %v1373 = vld [vmem:[%s1037 + $0xc0] sm:$0xff]
        %1374 = vmatprep.subr.bf16.mxu0 0
        %1375 = vmatpush1.bf16.msra.mxu0 0
        %1376 = vmatprep.subr.bf16.mxu0 0
        %1377 = vmatpush1.bf16.msra.mxu0 0
        %1378 = vmatprep.subr.bf16.mxu0 0
        %1379 = vmatpush1.bf16.msra.mxu0 0
        %1380 = vmatprep.subr.bf16.mxu0 0
        %1381 = vmatpush1.bf16.msra.mxu0 0
        %1382 = vmatprep.subr.bf16.mxu0 0
        %1383 = vmatpush1.bf16.msra.mxu0 0
        %1384 = vmatprep.subr.bf16.mxu0 0
        %1385 = vmatpush1.bf16.msra.mxu0 0
        %1386 = vmatprep.subr.bf16.mxu0 0
        %1387 = vmatpush1.bf16.msra.mxu0 0
        %1388 = vmatprep.subr.bf16.mxu0 0
        %1389 = vmatpush1.bf16.msra.mxu0 %v1371
        %1390 = vmatprep.subr.bf16.mxu0 0
        %1391 = vmatpush2.bf16.msra.mxu0 0
        %1392 = vmatprep.subr.bf16.mxu0 0
        %1393 = vmatpush2.bf16.msra.mxu0 0
        %1394 = vmatprep.subr.bf16.mxu0 0
        %1395 = vmatpush2.bf16.msra.mxu0 0
        %1396 = vmatprep.subr.bf16.mxu0 0
        %1397 = vmatpush2.bf16.msra.mxu0 0
        %1398 = vmatprep.subr.bf16.mxu0 0
        %1399 = vmatpush2.bf16.msra.mxu0 0
        %1400 = vmatprep.subr.bf16.mxu0 0
        %1401 = vmatpush2.bf16.msra.mxu0 0
        %1402 = vmatprep.subr.bf16.mxu0 0
        %1403 = vmatpush2.bf16.msra.mxu0 0
        %1404 = vmatprep.subr.bf16.mxu0 0
        %1405 = vmatpush2.bf16.msra.mxu0 0
        %1406 = vmatprep.mubr.bf16.mxu0 0
        %1407 = vmatmul.mubr.bf16.gmra.mxu0 %v458
        %v1408 = vpop.f32.mrf.mxu0
        %v1409 = vadd.f32 %v444, %v1408
        %v1410 = vpop.f32.mrf.mxu0
        %v1411 = vpop.f32.mrf.mxu0
        %v1412 = vadd.f32 %v449, %v1411
        %v1413 = vpop.f32.mrf.mxu0
        %1414 = vdwg.mxu0
        %v1415 = vmul.f32 %v1372, %v1409
        %v1416 = vmul.f32 %v1373, %v1412
        %1417 = vst [vmem:[%s1112 + $0x20] sm:$0xff] %v1415
        %1418 = vst [vmem:[%s1112 + $0x60] sm:$0xff] %v1416
        %v1419 = vld [vmem:[%s1037 + $0x58] sm:$0xff]
        %v1420 = vld [vmem:[%s1037 + $0xd8] sm:$0xff]
        %1421 = vadd.xlane.f32.xlu0 %v1419
        %v1422 = vpop.xlane.xlu0 %1421
        %1423 = vadd.xlane.f32.xlu0 %v1420
        %v1424 = vpop.xlane.xlu0 %1423
        %v1425 = vmul.f32 %v1422, %v403
        %v1426 = vmul.f32 %v1424, %v403
        %v1427 = vsub.f32 %v1419, %v1425
        %v1428 = vsub.f32 %v1420, %v1426
        %v1429 = vmul.f32 %v1427, %v1427
        %v1430 = vmul.f32 %v1428, %v1428
        %1431 = vadd.xlane.f32.xlu0 %v1429
        %v1432 = vpop.xlane.xlu0 %1431
        %1433 = vadd.xlane.f32.xlu0 %v1430
        %v1434 = vpop.xlane.xlu0 %1433
        %v1435 = vmul.f32 %v1432, %v403
        %v1436 = vmul.f32 %v1434, %v403
        %v1437 = vadd.f32 %v1435, 1e-05
        %v1438 = vadd.f32 %v1436, 1e-05
        %v1439 = vrsqrt.pop %v1437
        %v1440 = vrsqrt.pop %v1438
        %v1441 = vmul.f32 %v1427, %v1439
        %v1442 = vmul.f32 %v1428, %v1440
        %v1443 = vmul.f32 %v1441, %v426
        %v1444 = vmul.f32 %v1442, %v426
        %v1445 = vadd.f32 %v1443, %v434
        %v1446 = vadd.f32 %v1444, %v434
        %v1447 = vpack.c.bf16 %v1446, %v1445
        %v1448 = vld [vmem:[%s1037 + $0x50] sm:$0xff]
        %v1449 = vld [vmem:[%s1037 + $0xd0] sm:$0xff]
        %1450 = vmatprep.subr.bf16.mxu0 0
        %1451 = vmatpush1.bf16.msra.mxu0 0
        %1452 = vmatprep.subr.bf16.mxu0 0
        %1453 = vmatpush1.bf16.msra.mxu0 0
        %1454 = vmatprep.subr.bf16.mxu0 0
        %1455 = vmatpush1.bf16.msra.mxu0 0
        %1456 = vmatprep.subr.bf16.mxu0 0
        %1457 = vmatpush1.bf16.msra.mxu0 0
        %1458 = vmatprep.subr.bf16.mxu0 0
        %1459 = vmatpush1.bf16.msra.mxu0 0
        %1460 = vmatprep.subr.bf16.mxu0 0
        %1461 = vmatpush1.bf16.msra.mxu0 0
        %1462 = vmatprep.subr.bf16.mxu0 0
        %1463 = vmatpush1.bf16.msra.mxu0 0
        %1464 = vmatprep.subr.bf16.mxu0 0
        %1465 = vmatpush1.bf16.msra.mxu0 %v1447
        %1466 = vmatprep.subr.bf16.mxu0 0
        %1467 = vmatpush2.bf16.msra.mxu0 0
        %1468 = vmatprep.subr.bf16.mxu0 0
        %1469 = vmatpush2.bf16.msra.mxu0 0
        %1470 = vmatprep.subr.bf16.mxu0 0
        %1471 = vmatpush2.bf16.msra.mxu0 0
        %1472 = vmatprep.subr.bf16.mxu0 0
        %1473 = vmatpush2.bf16.msra.mxu0 0
        %1474 = vmatprep.subr.bf16.mxu0 0
        %1475 = vmatpush2.bf16.msra.mxu0 0
        %1476 = vmatprep.subr.bf16.mxu0 0
        %1477 = vmatpush2.bf16.msra.mxu0 0
        %1478 = vmatprep.subr.bf16.mxu0 0
        %1479 = vmatpush2.bf16.msra.mxu0 0
        %1480 = vmatprep.subr.bf16.mxu0 0
        %1481 = vmatpush2.bf16.msra.mxu0 0
        %1482 = vmatprep.mubr.bf16.mxu0 0
        %1483 = vmatmul.mubr.bf16.gmra.mxu0 %v458
        %v1484 = vpop.f32.mrf.mxu0
        %v1485 = vadd.f32 %v444, %v1484
        %v1486 = vpop.f32.mrf.mxu0
        %v1487 = vpop.f32.mrf.mxu0
        %v1488 = vadd.f32 %v449, %v1487
        %v1489 = vpop.f32.mrf.mxu0
        %1490 = vdwg.mxu0
        %v1491 = vmul.f32 %v1448, %v1485
        %v1492 = vmul.f32 %v1449, %v1488
        %1493 = vst [vmem:[%s1112 + $0x28] sm:$0xff] %v1491
        %1494 = vst [vmem:[%s1112 + $0x68] sm:$0xff] %v1492
        %v1495 = vld [vmem:[%s1037 + $0x68] sm:$0xff]
        %v1496 = vld [vmem:[%s1037 + $0xe8] sm:$0xff]
        %1497 = vadd.xlane.f32.xlu0 %v1495
        %v1498 = vpop.xlane.xlu0 %1497
        %1499 = vadd.xlane.f32.xlu0 %v1496
        %v1500 = vpop.xlane.xlu0 %1499
        %v1501 = vmul.f32 %v1498, %v403
        %v1502 = vmul.f32 %v1500, %v403
        %v1503 = vsub.f32 %v1495, %v1501
        %v1504 = vsub.f32 %v1496, %v1502
        %v1505 = vmul.f32 %v1503, %v1503
        %v1506 = vmul.f32 %v1504, %v1504
        %1507 = vadd.xlane.f32.xlu0 %v1505
        %v1508 = vpop.xlane.xlu0 %1507
        %1509 = vadd.xlane.f32.xlu0 %v1506
        %v1510 = vpop.xlane.xlu0 %1509
        %v1511 = vmul.f32 %v1508, %v403
        %v1512 = vmul.f32 %v1510, %v403
        %v1513 = vadd.f32 %v1511, 1e-05
        %v1514 = vadd.f32 %v1512, 1e-05
        %v1515 = vrsqrt.pop %v1513
        %v1516 = vrsqrt.pop %v1514
        %v1517 = vmul.f32 %v1503, %v1515
        %v1518 = vmul.f32 %v1504, %v1516
        %v1519 = vmul.f32 %v1517, %v426
        %v1520 = vmul.f32 %v1518, %v426
        %v1521 = vadd.f32 %v1519, %v434
        %v1522 = vadd.f32 %v1520, %v434
        %v1523 = vpack.c.bf16 %v1522, %v1521
        %v1524 = vld [vmem:[%s1037 + $0x60] sm:$0xff]
        %v1525 = vld [vmem:[%s1037 + $0xe0] sm:$0xff]
        %1526 = vmatprep.subr.bf16.mxu0 0
        %1527 = vmatpush1.bf16.msra.mxu0 0
        %1528 = vmatprep.subr.bf16.mxu0 0
        %1529 = vmatpush1.bf16.msra.mxu0 0
        %1530 = vmatprep.subr.bf16.mxu0 0
        %1531 = vmatpush1.bf16.msra.mxu0 0
        %1532 = vmatprep.subr.bf16.mxu0 0
        %1533 = vmatpush1.bf16.msra.mxu0 0
        %1534 = vmatprep.subr.bf16.mxu0 0
        %1535 = vmatpush1.bf16.msra.mxu0 0
        %1536 = vmatprep.subr.bf16.mxu0 0
        %1537 = vmatpush1.bf16.msra.mxu0 0
        %1538 = vmatprep.subr.bf16.mxu0 0
        %1539 = vmatpush1.bf16.msra.mxu0 0
        %1540 = vmatprep.subr.bf16.mxu0 0
        %1541 = vmatpush1.bf16.msra.mxu0 %v1523
        %1542 = vmatprep.subr.bf16.mxu0 0
        %1543 = vmatpush2.bf16.msra.mxu0 0
        %1544 = vmatprep.subr.bf16.mxu0 0
        %1545 = vmatpush2.bf16.msra.mxu0 0
        %1546 = vmatprep.subr.bf16.mxu0 0
        %1547 = vmatpush2.bf16.msra.mxu0 0
        %1548 = vmatprep.subr.bf16.mxu0 0
        %1549 = vmatpush2.bf16.msra.mxu0 0
        %1550 = vmatprep.subr.bf16.mxu0 0
        %1551 = vmatpush2.bf16.msra.mxu0 0
        %1552 = vmatprep.subr.bf16.mxu0 0
        %1553 = vmatpush2.bf16.msra.mxu0 0
        %1554 = vmatprep.subr.bf16.mxu0 0
        %1555 = vmatpush2.bf16.msra.mxu0 0
        %1556 = vmatprep.subr.bf16.mxu0 0
        %1557 = vmatpush2.bf16.msra.mxu0 0
        %1558 = vmatprep.mubr.bf16.mxu0 0
        %1559 = vmatmul.mubr.bf16.gmra.mxu0 %v458
        %v1560 = vpop.f32.mrf.mxu0
        %v1561 = vadd.f32 %v444, %v1560
        %v1562 = vpop.f32.mrf.mxu0
        %v1563 = vpop.f32.mrf.mxu0
        %v1564 = vadd.f32 %v449, %v1563
        %v1565 = vpop.f32.mrf.mxu0
        %1566 = vdwg.mxu0
        %v1567 = vmul.f32 %v1524, %v1561
        %v1568 = vmul.f32 %v1525, %v1564
        %1569 = vst [vmem:[%s1112 + $0x30] sm:$0xff] %v1567
        %1570 = vst [vmem:[%s1112 + $0x70] sm:$0xff] %v1568
        %v1571 = vld [vmem:[%s1037 + $0x78] sm:$0xff]
        %v1572 = vld [vmem:[%s1037 + $0xf8] sm:$0xff]
        %1573 = vadd.xlane.f32.xlu0 %v1571
        %v1574 = vpop.xlane.xlu0 %1573
        %1575 = vadd.xlane.f32.xlu0 %v1572
        %v1576 = vpop.xlane.xlu0 %1575
        %v1577 = vmul.f32 %v1574, %v403
        %v1578 = vmul.f32 %v1576, %v403
        %v1579 = vsub.f32 %v1571, %v1577
        %v1580 = vsub.f32 %v1572, %v1578
        %v1581 = vmul.f32 %v1579, %v1579
        %v1582 = vmul.f32 %v1580, %v1580
        %1583 = vadd.xlane.f32.xlu0 %v1581
        %v1584 = vpop.xlane.xlu0 %1583
        %1585 = vadd.xlane.f32.xlu0 %v1582
        %v1586 = vpop.xlane.xlu0 %1585
        %v1587 = vmul.f32 %v1584, %v403
        %v1588 = vmul.f32 %v1586, %v403
        %v1589 = vadd.f32 %v1587, 1e-05
        %v1590 = vadd.f32 %v1588, 1e-05
        %v1591 = vrsqrt.pop %v1589
        %v1592 = vrsqrt.pop %v1590
        %v1593 = vmul.f32 %v1579, %v1591
        %v1594 = vmul.f32 %v1580, %v1592
        %v1595 = vmul.f32 %v1593, %v426
        %v1596 = vmul.f32 %v1594, %v426
        %v1597 = vadd.f32 %v1595, %v434
        %v1598 = vadd.f32 %v1596, %v434
        %v1599 = vpack.c.bf16 %v1598, %v1597
        %v1600 = vld [vmem:[%s1037 + $0x70] sm:$0xff]
        %v1601 = vld [vmem:[%s1037 + $0xf0] sm:$0xff]
        %1602 = vmatprep.subr.bf16.mxu0 0
        %1603 = vmatpush1.bf16.msra.mxu0 0
        %1604 = vmatprep.subr.bf16.mxu0 0
        %1605 = vmatpush1.bf16.msra.mxu0 0
        %1606 = vmatprep.subr.bf16.mxu0 0
        %1607 = vmatpush1.bf16.msra.mxu0 0
        %1608 = vmatprep.subr.bf16.mxu0 0
        %1609 = vmatpush1.bf16.msra.mxu0 0
        %1610 = vmatprep.subr.bf16.mxu0 0
        %1611 = vmatpush1.bf16.msra.mxu0 0
        %1612 = vmatprep.subr.bf16.mxu0 0
        %1613 = vmatpush1.bf16.msra.mxu0 0
        %1614 = vmatprep.subr.bf16.mxu0 0
        %1615 = vmatpush1.bf16.msra.mxu0 0
        %1616 = vmatprep.subr.bf16.mxu0 0
        %1617 = vmatpush1.bf16.msra.mxu0 %v1599
        %1618 = vmatprep.subr.bf16.mxu0 0
        %1619 = vmatpush2.bf16.msra.mxu0 0
        %1620 = vmatprep.subr.bf16.mxu0 0
        %1621 = vmatpush2.bf16.msra.mxu0 0
        %1622 = vmatprep.subr.bf16.mxu0 0
        %1623 = vmatpush2.bf16.msra.mxu0 0
        %1624 = vmatprep.subr.bf16.mxu0 0
        %1625 = vmatpush2.bf16.msra.mxu0 0
        %1626 = vmatprep.subr.bf16.mxu0 0
        %1627 = vmatpush2.bf16.msra.mxu0 0
        %1628 = vmatprep.subr.bf16.mxu0 0
        %1629 = vmatpush2.bf16.msra.mxu0 0
        %1630 = vmatprep.subr.bf16.mxu0 0
        %1631 = vmatpush2.bf16.msra.mxu0 0
        %1632 = vmatprep.subr.bf16.mxu0 0
        %1633 = vmatpush2.bf16.msra.mxu0 0
        %1634 = vmatprep.mubr.bf16.mxu0 0
        %1635 = vmatmul.mubr.bf16.gmra.mxu0 %v458
        %v1636 = vpop.f32.mrf.mxu0
        %v1637 = vadd.f32 %v444, %v1636
        %v1638 = vpop.f32.mrf.mxu0
        %v1639 = vpop.f32.mrf.mxu0
        %v1640 = vadd.f32 %v449, %v1639
        %v1641 = vpop.f32.mrf.mxu0
        %1642 = vdwg.mxu0
        %v1643 = vmul.f32 %v1600, %v1637
        %v1644 = vmul.f32 %v1601, %v1640
        %1645 = vst [vmem:[%s1112 + $0x38] sm:$0xff] %v1643
        %1646 = vst [vmem:[%s1112 + $0x78] sm:$0xff] %v1644
        %s1647 = sand.u32 %s150, 1
        %s1648 = sand.u32 %s150, 1
        %s1649 = smul.addr %s1648, 256
        %s1650 = scalar_lea.vmem [#allocation3], %s1649
        // Predicated region
        $region64: #{grid_gating_unit.1} parent=58 // pred_check
          %p1651 = pneg %p160
        $region65: #{grid_gating_unit.1} parent=58 // pred_check_branch
          %1653 = sbr.rel (%p1651) target = $region67
        $region66: #{grid_gating_unit.1} parent=58 // pred_region
          %s1654 = smul.u32 2, %s20
          %s1655 = smul.u32 8, %s21
          %s1656 = smul.addr %s1654, 32
          %s1657 = sadd.s32 %s1655, %s1656
          %s1658 = smul.addr %s1657, 8
          %s1659 = scalar_lea.vmem %s5, %s1658
          // Predicated region
          $region68: #{grid_gating_unit.1} parent=66 // pred_check
            _
          $region69: #{grid_gating_unit.1} parent=66 // pred_check_branch
            %1661 = sbr.rel (0) target = $region71
          $region70: #{grid_gating_unit.1} parent=66 // pred_region
            // Predicated region
            $region72: #{grid_gating_unit.1} parent=70 // pred_check
              _
            $region73: #{grid_gating_unit.1} parent=70 // pred_check_branch
              %1663 = sbr.rel (0) target = $region75
            $region74: #{grid_gating_unit.1} parent=70 // pred_region
              loop: start=0, step=1, limit=1
              $region76: #{grid_gating_unit.1} parent=74 // loop_pre_header
                _
              $region77: #{grid_gating_unit.1} parent=74 // loop_header
                %s1665 = sphi 0, %s1669
                %p1666 = scmp.ge.s32.totalorder %s1665, 1
                %s1670 = sphi %s1650, %s1650
                %s1671 = sphi %s1659, %s1659
              $region78: #{grid_gating_unit.1} parent=74 // loop_header_branch
                %1668 = sbr.rel (%p1666) target = $region82
              $region79: #{grid_gating_unit.1} parent=74 // loop_body
                %v1672 = vld [vmem:[%s1670] sm:$0xff]
                %1673 = vst [vmem:[%s1671] sm:$0xff] %v1672
                %v1674 = vld [vmem:[%s1670 + $0x8] sm:$0xff]
                %1675 = vst [vmem:[%s1671 + $0x8] sm:$0xff] %v1674
                %v1676 = vld [vmem:[%s1670 + $0x10] sm:$0xff]
                %1677 = vst [vmem:[%s1671 + $0x10] sm:$0xff] %v1676
                %v1678 = vld [vmem:[%s1670 + $0x18] sm:$0xff]
                %1679 = vst [vmem:[%s1671 + $0x18] sm:$0xff] %v1678
                %v1680 = vld [vmem:[%s1670 + $0x20] sm:$0xff]
                %1681 = vst [vmem:[%s1671 + $0x20] sm:$0xff] %v1680
                %v1682 = vld [vmem:[%s1670 + $0x28] sm:$0xff]
                %1683 = vst [vmem:[%s1671 + $0x28] sm:$0xff] %v1682
                %v1684 = vld [vmem:[%s1670 + $0x30] sm:$0xff]
                %1685 = vst [vmem:[%s1671 + $0x30] sm:$0xff] %v1684
                %v1686 = vld [vmem:[%s1670 + $0x38] sm:$0xff]
                %1687 = vst [vmem:[%s1671 + $0x38] sm:$0xff] %v1686
                %v1688 = vld [vmem:[%s1670 + $0x40] sm:$0xff]
                %1689 = vst [vmem:[%s1671 + $0x80] sm:$0xff] %v1688
                %v1690 = vld [vmem:[%s1670 + $0x48] sm:$0xff]
                %1691 = vst [vmem:[%s1671 + $0x88] sm:$0xff] %v1690
                %v1692 = vld [vmem:[%s1670 + $0x50] sm:$0xff]
                %1693 = vst [vmem:[%s1671 + $0x90] sm:$0xff] %v1692
                %v1694 = vld [vmem:[%s1670 + $0x58] sm:$0xff]
                %1695 = vst [vmem:[%s1671 + $0x98] sm:$0xff] %v1694
                %v1696 = vld [vmem:[%s1670 + $0x60] sm:$0xff]
                %1697 = vst [vmem:[%s1671 + $0xa0] sm:$0xff] %v1696
                %v1698 = vld [vmem:[%s1670 + $0x68] sm:$0xff]
                %1699 = vst [vmem:[%s1671 + $0xa8] sm:$0xff] %v1698
                %v1700 = vld [vmem:[%s1670 + $0x70] sm:$0xff]
                %1701 = vst [vmem:[%s1671 + $0xb0] sm:$0xff] %v1700
                %v1702 = vld [vmem:[%s1670 + $0x78] sm:$0xff]
                %1703 = vst [vmem:[%s1671 + $0xb8] sm:$0xff] %v1702
                %v1704 = vld [vmem:[%s1670 + $0x80] sm:$0xff]
                %1705 = vst [vmem:[%s1671 + $0x100] sm:$0xff] %v1704
                %v1706 = vld [vmem:[%s1670 + $0x88] sm:$0xff]
                %1707 = vst [vmem:[%s1671 + $0x108] sm:$0xff] %v1706
                %v1708 = vld [vmem:[%s1670 + $0x90] sm:$0xff]
                %1709 = vst [vmem:[%s1671 + $0x110] sm:$0xff] %v1708
                %v1710 = vld [vmem:[%s1670 + $0x98] sm:$0xff]
                %1711 = vst [vmem:[%s1671 + $0x118] sm:$0xff] %v1710
                %v1712 = vld [vmem:[%s1670 + $0xa0] sm:$0xff]
                %1713 = vst [vmem:[%s1671 + $0x120] sm:$0xff] %v1712
                %v1714 = vld [vmem:[%s1670 + $0xa8] sm:$0xff]
                %1715 = vst [vmem:[%s1671 + $0x128] sm:$0xff] %v1714
                %v1716 = vld [vmem:[%s1670 + $0xb0] sm:$0xff]
                %1717 = vst [vmem:[%s1671 + $0x130] sm:$0xff] %v1716
                %v1718 = vld [vmem:[%s1670 + $0xb8] sm:$0xff]
                %1719 = vst [vmem:[%s1671 + $0x138] sm:$0xff] %v1718
                %v1720 = vld [vmem:[%s1670 + $0xc0] sm:$0xff]
                %1721 = vst [vmem:[%s1671 + $0x180] sm:$0xff] %v1720
                %v1722 = vld [vmem:[%s1670 + $0xc8] sm:$0xff]
                %1723 = vst [vmem:[%s1671 + $0x188] sm:$0xff] %v1722
                %v1724 = vld [vmem:[%s1670 + $0xd0] sm:$0xff]
                %1725 = vst [vmem:[%s1671 + $0x190] sm:$0xff] %v1724
                %v1726 = vld [vmem:[%s1670 + $0xd8] sm:$0xff]
                %1727 = vst [vmem:[%s1671 + $0x198] sm:$0xff] %v1726
                %v1728 = vld [vmem:[%s1670 + $0xe0] sm:$0xff]
                %1729 = vst [vmem:[%s1671 + $0x1a0] sm:$0xff] %v1728
                %v1730 = vld [vmem:[%s1670 + $0xe8] sm:$0xff]
                %1731 = vst [vmem:[%s1671 + $0x1a8] sm:$0xff] %v1730
                %v1732 = vld [vmem:[%s1670 + $0xf0] sm:$0xff]
                %1733 = vst [vmem:[%s1671 + $0x1b0] sm:$0xff] %v1732
                %v1734 = vld [vmem:[%s1670 + $0xf8] sm:$0xff]
                %1735 = vst [vmem:[%s1671 + $0x1b8] sm:$0xff] %v1734
              $region80: #{grid_gating_unit.1} parent=74 // loop_footer
                %s1669 = sadd.s32 1, %s1665
              $region81: #{grid_gating_unit.1} parent=74 // loop_footer_branch
                %1664 = sbr.rel target = $region77
              $region82: #{grid_gating_unit.1} parent=74 // loop_exit
                _
            $region75: #{grid_gating_unit.1} parent=70 // pred_fallthru
              _
            // Predicated region
            $region83: #{grid_gating_unit.1} parent=70 // pred_check
              _
            $region84: #{grid_gating_unit.1} parent=70 // pred_check_branch
              %1737 = sbr.rel target = $region86
            $region85: #{grid_gating_unit.1} parent=70 // pred_region
              _
            $region86: #{grid_gating_unit.1} parent=70 // pred_fallthru
              _
          $region71: #{grid_gating_unit.1} parent=66 // pred_fallthru
            _
          %1738 = vnop
        $region67: #{grid_gating_unit.1} parent=58 // pred_fallthru
          _
      $region59: #{grid_gating_unit.1} parent=5 // pred_fallthru
        _
      %p1739 = scmp.le.s32.totalorder 2, %s11
      // Predicated region
      $region87: #{grid_gating_unit.1} parent=5 // pred_check
        %p1740 = pneg %p1739
      $region88: #{grid_gating_unit.1} parent=5 // pred_check_branch
        %1742 = sbr.rel (%p1740) target = $region90
      $region89: #{grid_gating_unit.1} parent=5 // pred_region
        %s1743 = ssub.s32 %s11, 2
        // Predicated region
        $region91: #{grid_gating_unit.1} parent=89 // pred_check
          %p1744 = pneg %p166
        $region92: #{grid_gating_unit.1} parent=89 // pred_check_branch
          %1746 = sbr.rel (%p1744) target = $region94
        $region93: #{grid_gating_unit.1} parent=89 // pred_region
          %s1747 = sand.u32 %s151, 1
          %s1748 = sand.u32 %s151, 1
          %s1749 = smul.addr %s1748, 256
          %s1750 = scalar_lea.vmem [#allocation3], %s1749
        $region94: #{grid_gating_unit.1} parent=89 // pred_fallthru
          _
      $region90: #{grid_gating_unit.1} parent=5 // pred_fallthru
        _
    $region6: #{grid_gating_unit.1} parent=1 // loop_footer
      %s15 = sadd.s32 1, %s11
    $region7: #{grid_gating_unit.1} parent=1 // loop_footer_branch
      %10 = sbr.rel target = $region3
    $region8: #{grid_gating_unit.1} parent=1 // loop_exit
      _

</llo_original>
